<compile_context>
chip_gen: v5e
topology: v5e:2x2
jax: 0.10.0
libtpu: 0.0.40
codegen_flags: <defaults>
</compile_context>

<pallas_src>
import math
import numpy as np
import jax
import jax.numpy as jnp
from jax import lax
from jax.experimental import pallas as pl
from jax.experimental.pallas import tpu as pltpu

_EPS = 1e-5      # nn.InstanceNorm2d default eps
_SLOPE = 0.2     # nn.LeakyReLU(0.2)
_PAD = 128       # lane-aligned pad on each side of the shift scratch buffer


# ---------------------------------------------------------------------------
# Static helpers (numpy, trace time)
# ---------------------------------------------------------------------------
def _border_masks(H, W):
    """(9, H*W) validity masks for a 3x3 pad=1 conv in flattened (y*W + x) space."""
    HW = H * W
    M = np.zeros((9, HW), np.float32)
    for ky in range(3):
        for kx in range(3):
            k = ky * 3 + kx
            dy, dx = ky - 1, kx - 1
            for y in range(H):
                for x in range(W):
                    if 0 <= y + dy < H and 0 <= x + dx < W:
                        M[k, y * W + x] = 1.0
    return M


def _pool_mat(H, W, layer_type):
    """Matrix form of DownSample(layer_type). Returns (P, H_out, W_out)."""
    if layer_type == 'none':
        return np.eye(H * W, dtype=np.float32), H, W
    if layer_type == 'timepreserve':          # avg_pool2d(x, (2, 1))
        H2, W2 = H // 2, W
        P = np.zeros((H2 * W2, H * W), np.float32)
        for y2 in range(H2):
            for x in range(W):
                for a in range(2):
                    P[y2 * W2 + x, (2 * y2 + a) * W + x] = 0.5
        return P, H2, W2
    if layer_type == 'half':                  # avg_pool2d(x, 2)
        H2, W2 = H // 2, W // 2
        P = np.zeros((H2 * W2, H * W), np.float32)
        for y2 in range(H2):
            for x2 in range(W2):
                for a in range(2):
                    for b in range(2):
                        P[y2 * W2 + x2, (2 * y2 + a) * W + (2 * x2 + b)] = 0.25
        return P, H2, W2
    raise RuntimeError('unexpected downsample type %s' % layer_type)


def _conv_offsets(W):
    """Flattened-index offsets of the 9 taps (k = ky*3 + kx)."""
    return [(ky - 1) * W + (kx - 1) for ky in range(3) for kx in range(3)]


# ---------------------------------------------------------------------------
# Pallas kernel: one batch element per grid step, full residual block fused.
# Activations are (C, HW): channels on sublanes, HW on lanes (lane-dense).
# ---------------------------------------------------------------------------
def _make_kernel(*, normalize, learned_sc, downsample, Cin, Cout, H, W, H2, W2):
    HW, HW2 = H * W, H2 * W2
    BUFW = 2 * _PAD + HW                     # zero-padded shift buffer width
    offs1 = _conv_offsets(W)
    offs2 = _conv_offsets(W2)
    inv_sqrt2 = 1.0 / math.sqrt(2.0)

    def kernel(x_ref, m1_ref, m2_ref, pt_ref,
               n1w_ref, n1b_ref, n2w_ref, n2b_ref,
               w1t_ref, b1_ref, w2t_ref, b2_ref, wsct_ref,
               out_ref, buf_ref):

        def inst_norm(h, w, b):
            # E[x^2] - mean^2: the two lane reductions are independent.
            mean = jnp.mean(h, axis=1, keepdims=True)
            var = jnp.mean(h * h, axis=1, keepdims=True) - mean * mean
            return (h - mean) * (lax.rsqrt(var + _EPS) * w) + b

        def leaky(h):
            return jnp.where(h > 0, h, _SLOPE * h)

        def conv3x3(h, wt_ref, b_ref, m_ref, offs, hw):
            # Zero the padded scratch, write h at a lane-aligned offset, then read
            # the nine taps as statically-offset lane slices + border masks.
            # Only the (Cout,Cin)x(Cin,hw) weight matmuls go to the MXU.
            buf_ref[...] = jnp.zeros((Cin, BUFW), jnp.float32)
            buf_ref[:, pl.ds(_PAD, hw)] = h
            co = wt_ref.shape[1]
            acc = jnp.zeros((co, hw), jnp.float32)
            for k in range(9):               # static unroll
                g = buf_ref[:, pl.ds(_PAD + offs[k], hw)] * m_ref[pl.ds(k, 1), :]
                acc = acc + jnp.dot(wt_ref[k], g,
                                    preferred_element_type=jnp.float32)
            return acc + b_ref[...]

        def pool(h):
            if downsample == 'none':
                return h
            # (C, HW) @ (HW, HW2): K lane-dense, output lane width HW2.
            return jnp.dot(h, pt_ref[...], preferred_element_type=jnp.float32)

        x = x_ref[0]                                      # (Cin, HW)

        # ----- shortcut branch: pool FIRST, then 1x1 conv (pool is linear) -----
        sc = pool(x)                                      # (Cin, HW2)
        if learned_sc:
            sc = jnp.dot(wsct_ref[...], sc,
                         preferred_element_type=jnp.float32)   # (Cout, HW2)

        # ----- residual branch -----
        h = x
        if normalize:
            h = inst_norm(h, n1w_ref[...], n1b_ref[...])
        h = leaky(h)
        h = conv3x3(h, w1t_ref, b1_ref, m1_ref, offs1, HW)      # (Cin, HW)
        h = pool(h)                                             # (Cin, HW2)
        if normalize:
            h = inst_norm(h, n2w_ref[...], n2b_ref[...])
        h = leaky(h)
        h = conv3x3(h, w2t_ref, b2_ref, m2_ref, offs2, HW2)     # (Cout, HW2)

        out_ref[0] = (sc + h) * inv_sqrt2

    return kernel


# ---------------------------------------------------------------------------
# Wrapper
# ---------------------------------------------------------------------------
def resblk_pallas(x_nchw, params, *, normalize=True, downsample='half'):
    N, Cin, H, W = x_nchw.shape
    Cout = params['conv2_w'].shape[-1]
    HW = H * W

    P_np, H2, W2 = _pool_mat(H, W, downsample)
    HW2 = H2 * W2

    M1 = jnp.asarray(_border_masks(H, W))                 # (9, HW)
    M2 = jnp.asarray(_border_masks(H2, W2))               # (9, HW2)
    if downsample == 'none':
        PT = jnp.zeros((1, 1), jnp.float32)               # unused placeholder
    else:
        PT = jnp.asarray(P_np.T)                          # (HW, HW2)

    # NCHW -> (N, C, H*W): channel-major, no transpose needed.
    x_flat = x_nchw.reshape(N, Cin, HW)

    # Per-tap transposed weights: wt[k] = W_k^T with shape (Cout_k, Cin).
    w1t = jnp.transpose(params['conv1_w'], (0, 2, 1))     # (9, Cin, Cin)
    w2t = jnp.transpose(params['conv2_w'], (0, 2, 1))     # (9, Cout, Cin)

    wsc = params.get('conv1x1_w')
    learned_sc = wsc is not None
    wsct = (jnp.transpose(wsc) if learned_sc
            else jnp.eye(Cin, dtype=jnp.float32))         # (Cout, Cin)

    n1w = params['n1_w'].reshape(Cin, 1)
    n1b = params['n1_b'].reshape(Cin, 1)
    n2w = params['n2_w'].reshape(Cin, 1)
    n2b = params['n2_b'].reshape(Cin, 1)
    b1 = params['conv1_b'].reshape(Cin, 1)
    b2 = params['conv2_b'].reshape(Cout, 1)

    inputs = (x_flat, M1, M2, PT, n1w, n1b, n2w, n2b, w1t, b1, w2t, b2, wsct)

    def const_spec(arr):
        nd = arr.ndim
        return pl.BlockSpec(arr.shape, lambda n, nd=nd: (0,) * nd)

    in_specs = [pl.BlockSpec((1, Cin, HW), lambda n: (n, 0, 0))] + \
               [const_spec(a) for a in inputs[1:]]
    out_specs = pl.BlockSpec((1, Cout, HW2), lambda n: (n, 0, 0))

    kernel = _make_kernel(normalize=normalize, learned_sc=learned_sc,
                          downsample=downsample, Cin=Cin, Cout=Cout,
                          H=H, W=W, H2=H2, W2=W2)

    out_flat = pl.pallas_call(
        kernel,
        out_shape=jax.ShapeDtypeStruct((N, Cout, HW2), jnp.float32),
        grid=(N,),
        in_specs=in_specs,
        out_specs=out_specs,
        scratch_shapes=[pltpu.VMEM((Cin, 2 * _PAD + HW), jnp.float32)],
        compiler_params=pltpu.CompilerParams(dimension_semantics=("parallel",)),
    )(*inputs)

    # (N, Cout, H2*W2) -> NCHW
    return out_flat.reshape(N, Cout, H2, W2)


# ---------------------------------------------------------------------------
# Pure-JAX reference (mirrors the PyTorch forward exactly), for validation.
# ---------------------------------------------------------------------------
def resblk_reference(x_nchw, params, *, normalize=True, downsample='half'):
    x = jnp.transpose(x_nchw, (0, 2, 3, 1))          # NHWC

    def inst_norm(h, w, b):
        mean = h.mean(axis=(1, 2), keepdims=True)
        var = ((h - mean) ** 2).mean(axis=(1, 2), keepdims=True)
        return (h - mean) * lax.rsqrt(var + _EPS) * w.reshape(1, 1, 1, -1) \
               + b.reshape(1, 1, 1, -1)

    def leaky(h):
        return jnp.where(h > 0, h, _SLOPE * h)

    def conv3x3(h, w9, b):
        w = w9.reshape(3, 3, w9.shape[1], w9.shape[2])     # HWIO
        y = lax.conv_general_dilated(h, w, (1, 1), ((1, 1), (1, 1)),
                                     dimension_numbers=('NHWC', 'HWIO', 'NHWC'))
        return y + b.reshape(1, 1, 1, -1)

    def pool(h):
        n, hh, ww, c = h.shape
        if downsample == 'none':
            return h
        if downsample == 'timepreserve':
            return h.reshape(n, hh // 2, 2, ww, c).mean(axis=2)
        return h.reshape(n, hh // 2, 2, ww // 2, 2, c).mean(axis=(2, 4))

    h = x
    if normalize:
        h = inst_norm(h, params['n1_w'], params['n1_b'])
    h = leaky(h)
    h = conv3x3(h, params['conv1_w'], params['conv1_b'])
    h = pool(h)
    if normalize:
        h = inst_norm(h, params['n2_w'], params['n2_b'])
    h = leaky(h)
    h = conv3x3(h, params['conv2_w'], params['conv2_b'])

    sc = jnp.einsum('nhwc,co->nhwo', x, params['conv1x1_w'])
    sc = pool(sc)
    out = (sc + h) / math.sqrt(2.0)
    return jnp.transpose(out, (0, 3, 1, 2))


# ---------------------------------------------------------------------------
if __name__ == "__main__":
    dim_in, dim_out = 4, 8          # learned_sc = True since dim_in != dim_out
    N, H, W = 2, 16, 16

    key = jax.random.PRNGKey(0)
    ks = jax.random.split(key, 10)
    x = jax.random.normal(ks[0], (N, dim_in, H, W), jnp.float32)

    # Deterministic synthetic parameters (conv weights stored as (9, Cin, Cout)
    # with k = ky*3 + kx, i.e. the HWIO layout flattened over the 3x3 taps).
    params = {
        'n1_w': (1.0 + 0.1 * jax.random.normal(ks[1], (1, dim_in))).astype(jnp.float32),
        'n1_b': (0.1 * jax.random.normal(ks[2], (1, dim_in))).astype(jnp.float32),
        'n2_w': (1.0 + 0.1 * jax.random.normal(ks[3], (1, dim_in))).astype(jnp.float32),
        'n2_b': (0.1 * jax.random.normal(ks[4], (1, dim_in))).astype(jnp.float32),
        'conv1_w': (0.1 * jax.random.normal(ks[5], (9, dim_in, dim_in))).astype(jnp.float32),
        'conv1_b': (0.1 * jax.random.normal(ks[6], (1, dim_in))).astype(jnp.float32),
        'conv2_w': (0.1 * jax.random.normal(ks[7], (9, dim_in, dim_out))).astype(jnp.float32),
        'conv2_b': (0.1 * jax.random.normal(ks[8], (1, dim_out))).astype(jnp.float32),
        'conv1x1_w': (0.1 * jax.random.normal(ks[9], (dim_in, dim_out))).astype(jnp.float32),
    }

    out = resblk_pallas(x, params, normalize=True, downsample='half')
    out = jax.block_until_ready(out)

    ref = resblk_reference(x, params, normalize=True, downsample='half')
    assert out.shape == (N, dim_out, H // 2, W // 2), out.shape
    np.testing.assert_allclose(np.asarray(out), np.asarray(ref), rtol=1e-4, atol=1e-4)

    print("KERNEL_OK")
</pallas_src>

<mosaic_0001>
module attributes {stable_mosaic.version = 11 : i64} {
  func.func @kernel(%arg0: i32, %arg1: memref<1x4x256xf32, #tpu.memory_space<vmem>>, %arg2: memref<9x256xf32, #tpu.memory_space<vmem>>, %arg3: memref<9x64xf32, #tpu.memory_space<vmem>>, %arg4: memref<256x64xf32, #tpu.memory_space<vmem>>, %arg5: memref<4x1xf32, #tpu.memory_space<vmem>>, %arg6: memref<4x1xf32, #tpu.memory_space<vmem>>, %arg7: memref<4x1xf32, #tpu.memory_space<vmem>>, %arg8: memref<4x1xf32, #tpu.memory_space<vmem>>, %arg9: memref<9x4x4xf32, #tpu.memory_space<vmem>>, %arg10: memref<4x1xf32, #tpu.memory_space<vmem>>, %arg11: memref<9x8x4xf32, #tpu.memory_space<vmem>>, %arg12: memref<8x1xf32, #tpu.memory_space<vmem>>, %arg13: memref<8x4xf32, #tpu.memory_space<vmem>>, %arg14: memref<1x8x64xf32, #tpu.memory_space<vmem>>, %arg15: memref<4x512xf32, #tpu.memory_space<vmem>>) attributes {dimension_semantics = [#tpu.dimension_semantics<parallel>], iteration_bounds = array<i64: 2>, scalar_prefetch = 0 : i64, scratch_operands = 1 : i64, tpu.core_type = #tpu.core_type<tc>, window_params = [{transform_indices = @transform_0, window_bounds = array<i64: 1, 4, 256>}, {pipeline_mode = #tpu.pipeline_mode<synchronous>, transform_indices = @transform_1, window_bounds = array<i64: 9, 256>}, {pipeline_mode = #tpu.pipeline_mode<synchronous>, transform_indices = @transform_2, window_bounds = array<i64: 9, 64>}, {pipeline_mode = #tpu.pipeline_mode<synchronous>, transform_indices = @transform_3, window_bounds = array<i64: 256, 64>}, {pipeline_mode = #tpu.pipeline_mode<synchronous>, transform_indices = @transform_4, window_bounds = array<i64: 4, 1>}, {pipeline_mode = #tpu.pipeline_mode<synchronous>, transform_indices = @transform_5, window_bounds = array<i64: 4, 1>}, {pipeline_mode = #tpu.pipeline_mode<synchronous>, transform_indices = @transform_6, window_bounds = array<i64: 4, 1>}, {pipeline_mode = #tpu.pipeline_mode<synchronous>, transform_indices = @transform_7, window_bounds = array<i64: 4, 1>}, {pipeline_mode = #tpu.pipeline_mode<synchronous>, transform_indices = @transform_8, window_bounds = array<i64: 9, 4, 4>}, {pipeline_mode = #tpu.pipeline_mode<synchronous>, transform_indices = @transform_9, window_bounds = array<i64: 4, 1>}, {pipeline_mode = #tpu.pipeline_mode<synchronous>, transform_indices = @transform_10, window_bounds = array<i64: 9, 8, 4>}, {pipeline_mode = #tpu.pipeline_mode<synchronous>, transform_indices = @transform_11, window_bounds = array<i64: 8, 1>}, {pipeline_mode = #tpu.pipeline_mode<synchronous>, transform_indices = @transform_12, window_bounds = array<i64: 8, 4>}, {transform_indices = @transform_13, window_bounds = array<i64: 1, 8, 64>}]} {
    %c0 = arith.constant 0 : index
    %c0_0 = arith.constant 0 : index
    %c0_1 = arith.constant 0 : index
    %0 = vector.load %arg1[%c0, %c0_0, %c0_1] : memref<1x4x256xf32, #tpu.memory_space<vmem>>, vector<1x4x256xf32>
    %1 = vector.shape_cast %0 : vector<1x4x256xf32> to vector<4x256xf32>
    %c0_2 = arith.constant 0 : index
    %c0_3 = arith.constant 0 : index
    %2 = vector.load %arg4[%c0_2, %c0_3] : memref<256x64xf32, #tpu.memory_space<vmem>>, vector<256x64xf32>
    %cst = arith.constant dense<0.000000e+00> : vector<4x64xf32>
    %3 = tpu.matmul %1, %2, %cst {dimension_numbers = #tpu.dot_dimension_numbers<[1], [0], [0], [1], [0, 0, 1, 1], [], []>} : vector<4x256xf32>, vector<256x64xf32>, vector<4x64xf32> -> vector<4x64xf32>
    %c0_4 = arith.constant 0 : index
    %c0_5 = arith.constant 0 : index
    %4 = vector.load %arg13[%c0_4, %c0_5] : memref<8x4xf32, #tpu.memory_space<vmem>>, vector<8x4xf32>
    %cst_6 = arith.constant dense<0.000000e+00> : vector<8x64xf32>
    %5 = tpu.matmul %4, %3, %cst_6 {dimension_numbers = #tpu.dot_dimension_numbers<[1], [0], [0], [1], [0, 0, 1, 1], [], []>} : vector<8x4xf32>, vector<4x64xf32>, vector<8x64xf32> -> vector<8x64xf32>
    %c0_7 = arith.constant 0 : index
    %c0_8 = arith.constant 0 : index
    %6 = vector.load %arg5[%c0_7, %c0_8] : memref<4x1xf32, #tpu.memory_space<vmem>>, vector<4x1xf32>
    %c0_9 = arith.constant 0 : index
    %c0_10 = arith.constant 0 : index
    %7 = vector.load %arg6[%c0_9, %c0_10] : memref<4x1xf32, #tpu.memory_space<vmem>>, vector<4x1xf32>
    %cst_11 = arith.constant dense<0.000000e+00> : vector<4xf32>
    %8 = vector.multi_reduction <add>, %1, %cst_11 [1] : vector<4x256xf32> to vector<4xf32>
    %9 = vector.shape_cast %8 : vector<4xf32> to vector<4x1xf32>
    %cst_12 = arith.constant 2.560000e+02 : f32
    %10 = vector.broadcast %cst_12 : f32 to vector<4x1xf32>
    %11 = arith.divf %9, %10 : vector<4x1xf32>
    %12 = arith.mulf %1, %1 : vector<4x256xf32>
    %cst_13 = arith.constant dense<0.000000e+00> : vector<4xf32>
    %13 = vector.multi_reduction <add>, %12, %cst_13 [1] : vector<4x256xf32> to vector<4xf32>
    %14 = vector.shape_cast %13 : vector<4xf32> to vector<4x1xf32>
    %cst_14 = arith.constant 2.560000e+02 : f32
    %15 = vector.broadcast %cst_14 : f32 to vector<4x1xf32>
    %16 = arith.divf %14, %15 : vector<4x1xf32>
    %17 = arith.mulf %11, %11 : vector<4x1xf32>
    %18 = arith.subf %16, %17 : vector<4x1xf32>
    %19 = vector.broadcast %11 : vector<4x1xf32> to vector<4x256xf32>
    %20 = arith.subf %1, %19 : vector<4x256xf32>
    %cst_15 = arith.constant 9.99999974E-6 : f32
    %21 = vector.broadcast %cst_15 : f32 to vector<4x1xf32>
    %22 = arith.addf %18, %21 : vector<4x1xf32>
    %23 = math.rsqrt %22 : vector<4x1xf32>
    %24 = arith.mulf %23, %6 : vector<4x1xf32>
    %25 = vector.broadcast %24 : vector<4x1xf32> to vector<4x256xf32>
    %26 = arith.mulf %20, %25 : vector<4x256xf32>
    %27 = vector.broadcast %7 : vector<4x1xf32> to vector<4x256xf32>
    %28 = arith.addf %26, %27 : vector<4x256xf32>
    %cst_16 = arith.constant 0.000000e+00 : f32
    %29 = vector.broadcast %cst_16 : f32 to vector<4x256xf32>
    %30 = arith.cmpf ogt, %28, %29 : vector<4x256xf32>
    %cst_17 = arith.constant 2.000000e-01 : f32
    %31 = vector.broadcast %cst_17 : f32 to vector<4x256xf32>
    %32 = arith.mulf %31, %28 : vector<4x256xf32>
    %33 = arith.select %30, %28, %32 : vector<4x256xi1>, vector<4x256xf32>
    %cst_18 = arith.constant 0.000000e+00 : f32
    %34 = vector.broadcast %cst_18 : f32 to vector<4x512xf32>
    %c0_19 = arith.constant 0 : index
    %c0_20 = arith.constant 0 : index
    %35 = vector.load %arg15[%c0_19, %c0_20] : memref<4x512xf32, #tpu.memory_space<vmem>>, vector<4x512xf32>
    tpu.vector_store %arg15[%c0_19, %c0_20], %34 {strides = array<i32>} : memref<4x512xf32, #tpu.memory_space<vmem>>, vector<4x512xf32>,
    %c0_21 = arith.constant 0 : index
    %c128 = arith.constant 128 : index
    %36 = vector.load %arg15[%c0_21, %c128] : memref<4x512xf32, #tpu.memory_space<vmem>>, vector<4x256xf32>
    tpu.vector_store %arg15[%c0_21, %c128], %33 {strides = array<i32>} : memref<4x512xf32, #tpu.memory_space<vmem>>, vector<4x256xf32>,
    %cst_22 = arith.constant 0.000000e+00 : f32
    %37 = vector.broadcast %cst_22 : f32 to vector<4x256xf32>
    %c0_23 = arith.constant 0 : index
    %c111 = arith.constant 111 : index
    %38 = vector.load %arg15[%c0_23, %c111] : memref<4x512xf32, #tpu.memory_space<vmem>>, vector<4x256xf32>
    %c0_24 = arith.constant 0 : index
    %c0_25 = arith.constant 0 : index
    %39 = vector.load %arg2[%c0_24, %c0_25] : memref<9x256xf32, #tpu.memory_space<vmem>>, vector<1x256xf32>
    %40 = vector.broadcast %39 : vector<1x256xf32> to vector<4x256xf32>
    %41 = arith.mulf %38, %40 : vector<4x256xf32>
    %c0_26 = arith.constant 0 : index
    %c0_27 = arith.constant 0 : index
    %c0_28 = arith.constant 0 : index
    %42 = vector.load %arg9[%c0_26, %c0_27, %c0_28] : memref<9x4x4xf32, #tpu.memory_space<vmem>>, vector<1x4x4xf32>
    %43 = vector.shape_cast %42 : vector<1x4x4xf32> to vector<4x4xf32>
    %cst_29 = arith.constant dense<0.000000e+00> : vector<4x256xf32>
    %44 = tpu.matmul %43, %41, %cst_29 {dimension_numbers = #tpu.dot_dimension_numbers<[1], [0], [0], [1], [0, 0, 1, 1], [], []>} : vector<4x4xf32>, vector<4x256xf32>, vector<4x256xf32> -> vector<4x256xf32>
    %45 = arith.addf %37, %44 : vector<4x256xf32>
    %c0_30 = arith.constant 0 : index
    %c112 = arith.constant 112 : index
    %46 = vector.load %arg15[%c0_30, %c112] : memref<4x512xf32, #tpu.memory_space<vmem>>, vector<4x256xf32>
    %c1 = arith.constant 1 : index
    %c0_31 = arith.constant 0 : index
    %47 = vector.load %arg2[%c1, %c0_31] : memref<9x256xf32, #tpu.memory_space<vmem>>, vector<1x256xf32>
    %48 = vector.broadcast %47 : vector<1x256xf32> to vector<4x256xf32>
    %49 = arith.mulf %46, %48 : vector<4x256xf32>
    %c1_32 = arith.constant 1 : index
    %c0_33 = arith.constant 0 : index
    %c0_34 = arith.constant 0 : index
    %50 = vector.load %arg9[%c1_32, %c0_33, %c0_34] : memref<9x4x4xf32, #tpu.memory_space<vmem>>, vector<1x4x4xf32>
    %51 = vector.shape_cast %50 : vector<1x4x4xf32> to vector<4x4xf32>
    %cst_35 = arith.constant dense<0.000000e+00> : vector<4x256xf32>
    %52 = tpu.matmul %51, %49, %cst_35 {dimension_numbers = #tpu.dot_dimension_numbers<[1], [0], [0], [1], [0, 0, 1, 1], [], []>} : vector<4x4xf32>, vector<4x256xf32>, vector<4x256xf32> -> vector<4x256xf32>
    %53 = arith.addf %45, %52 : vector<4x256xf32>
    %c0_36 = arith.constant 0 : index
    %c113 = arith.constant 113 : index
    %54 = vector.load %arg15[%c0_36, %c113] : memref<4x512xf32, #tpu.memory_space<vmem>>, vector<4x256xf32>
    %c2 = arith.constant 2 : index
    %c0_37 = arith.constant 0 : index
    %55 = vector.load %arg2[%c2, %c0_37] : memref<9x256xf32, #tpu.memory_space<vmem>>, vector<1x256xf32>
    %56 = vector.broadcast %55 : vector<1x256xf32> to vector<4x256xf32>
    %57 = arith.mulf %54, %56 : vector<4x256xf32>
    %c2_38 = arith.constant 2 : index
    %c0_39 = arith.constant 0 : index
    %c0_40 = arith.constant 0 : index
    %58 = vector.load %arg9[%c2_38, %c0_39, %c0_40] : memref<9x4x4xf32, #tpu.memory_space<vmem>>, vector<1x4x4xf32>
    %59 = vector.shape_cast %58 : vector<1x4x4xf32> to vector<4x4xf32>
    %cst_41 = arith.constant dense<0.000000e+00> : vector<4x256xf32>
    %60 = tpu.matmul %59, %57, %cst_41 {dimension_numbers = #tpu.dot_dimension_numbers<[1], [0], [0], [1], [0, 0, 1, 1], [], []>} : vector<4x4xf32>, vector<4x256xf32>, vector<4x256xf32> -> vector<4x256xf32>
    %61 = arith.addf %53, %60 : vector<4x256xf32>
    %c0_42 = arith.constant 0 : index
    %c127 = arith.constant 127 : index
    %62 = vector.load %arg15[%c0_42, %c127] : memref<4x512xf32, #tpu.memory_space<vmem>>, vector<4x256xf32>
    %c3 = arith.constant 3 : index
    %c0_43 = arith.constant 0 : index
    %63 = vector.load %arg2[%c3, %c0_43] : memref<9x256xf32, #tpu.memory_space<vmem>>, vector<1x256xf32>
    %64 = vector.broadcast %63 : vector<1x256xf32> to vector<4x256xf32>
    %65 = arith.mulf %62, %64 : vector<4x256xf32>
    %c3_44 = arith.constant 3 : index
    %c0_45 = arith.constant 0 : index
    %c0_46 = arith.constant 0 : index
    %66 = vector.load %arg9[%c3_44, %c0_45, %c0_46] : memref<9x4x4xf32, #tpu.memory_space<vmem>>, vector<1x4x4xf32>
    %67 = vector.shape_cast %66 : vector<1x4x4xf32> to vector<4x4xf32>
    %cst_47 = arith.constant dense<0.000000e+00> : vector<4x256xf32>
    %68 = tpu.matmul %67, %65, %cst_47 {dimension_numbers = #tpu.dot_dimension_numbers<[1], [0], [0], [1], [0, 0, 1, 1], [], []>} : vector<4x4xf32>, vector<4x256xf32>, vector<4x256xf32> -> vector<4x256xf32>
    %69 = arith.addf %61, %68 : vector<4x256xf32>
    %c0_48 = arith.constant 0 : index
    %c128_49 = arith.constant 128 : index
    %70 = vector.load %arg15[%c0_48, %c128_49] : memref<4x512xf32, #tpu.memory_space<vmem>>, vector<4x256xf32>
    %c4 = arith.constant 4 : index
    %c0_50 = arith.constant 0 : index
    %71 = vector.load %arg2[%c4, %c0_50] : memref<9x256xf32, #tpu.memory_space<vmem>>, vector<1x256xf32>
    %72 = vector.broadcast %71 : vector<1x256xf32> to vector<4x256xf32>
    %73 = arith.mulf %70, %72 : vector<4x256xf32>
    %c4_51 = arith.constant 4 : index
    %c0_52 = arith.constant 0 : index
    %c0_53 = arith.constant 0 : index
    %74 = vector.load %arg9[%c4_51, %c0_52, %c0_53] : memref<9x4x4xf32, #tpu.memory_space<vmem>>, vector<1x4x4xf32>
    %75 = vector.shape_cast %74 : vector<1x4x4xf32> to vector<4x4xf32>
    %cst_54 = arith.constant dense<0.000000e+00> : vector<4x256xf32>
    %76 = tpu.matmul %75, %73, %cst_54 {dimension_numbers = #tpu.dot_dimension_numbers<[1], [0], [0], [1], [0, 0, 1, 1], [], []>} : vector<4x4xf32>, vector<4x256xf32>, vector<4x256xf32> -> vector<4x256xf32>
    %77 = arith.addf %69, %76 : vector<4x256xf32>
    %c0_55 = arith.constant 0 : index
    %c129 = arith.constant 129 : index
    %78 = vector.load %arg15[%c0_55, %c129] : memref<4x512xf32, #tpu.memory_space<vmem>>, vector<4x256xf32>
    %c5 = arith.constant 5 : index
    %c0_56 = arith.constant 0 : index
    %79 = vector.load %arg2[%c5, %c0_56] : memref<9x256xf32, #tpu.memory_space<vmem>>, vector<1x256xf32>
    %80 = vector.broadcast %79 : vector<1x256xf32> to vector<4x256xf32>
    %81 = arith.mulf %78, %80 : vector<4x256xf32>
    %c5_57 = arith.constant 5 : index
    %c0_58 = arith.constant 0 : index
    %c0_59 = arith.constant 0 : index
    %82 = vector.load %arg9[%c5_57, %c0_58, %c0_59] : memref<9x4x4xf32, #tpu.memory_space<vmem>>, vector<1x4x4xf32>
    %83 = vector.shape_cast %82 : vector<1x4x4xf32> to vector<4x4xf32>
    %cst_60 = arith.constant dense<0.000000e+00> : vector<4x256xf32>
    %84 = tpu.matmul %83, %81, %cst_60 {dimension_numbers = #tpu.dot_dimension_numbers<[1], [0], [0], [1], [0, 0, 1, 1], [], []>} : vector<4x4xf32>, vector<4x256xf32>, vector<4x256xf32> -> vector<4x256xf32>
    %85 = arith.addf %77, %84 : vector<4x256xf32>
    %c0_61 = arith.constant 0 : index
    %c143 = arith.constant 143 : index
    %86 = vector.load %arg15[%c0_61, %c143] : memref<4x512xf32, #tpu.memory_space<vmem>>, vector<4x256xf32>
    %c6 = arith.constant 6 : index
    %c0_62 = arith.constant 0 : index
    %87 = vector.load %arg2[%c6, %c0_62] : memref<9x256xf32, #tpu.memory_space<vmem>>, vector<1x256xf32>
    %88 = vector.broadcast %87 : vector<1x256xf32> to vector<4x256xf32>
    %89 = arith.mulf %86, %88 : vector<4x256xf32>
    %c6_63 = arith.constant 6 : index
    %c0_64 = arith.constant 0 : index
    %c0_65 = arith.constant 0 : index
    %90 = vector.load %arg9[%c6_63, %c0_64, %c0_65] : memref<9x4x4xf32, #tpu.memory_space<vmem>>, vector<1x4x4xf32>
    %91 = vector.shape_cast %90 : vector<1x4x4xf32> to vector<4x4xf32>
    %cst_66 = arith.constant dense<0.000000e+00> : vector<4x256xf32>
    %92 = tpu.matmul %91, %89, %cst_66 {dimension_numbers = #tpu.dot_dimension_numbers<[1], [0], [0], [1], [0, 0, 1, 1], [], []>} : vector<4x4xf32>, vector<4x256xf32>, vector<4x256xf32> -> vector<4x256xf32>
    %93 = arith.addf %85, %92 : vector<4x256xf32>
    %c0_67 = arith.constant 0 : index
    %c144 = arith.constant 144 : index
    %94 = vector.load %arg15[%c0_67, %c144] : memref<4x512xf32, #tpu.memory_space<vmem>>, vector<4x256xf32>
    %c7 = arith.constant 7 : index
    %c0_68 = arith.constant 0 : index
    %95 = vector.load %arg2[%c7, %c0_68] : memref<9x256xf32, #tpu.memory_space<vmem>>, vector<1x256xf32>
    %96 = vector.broadcast %95 : vector<1x256xf32> to vector<4x256xf32>
    %97 = arith.mulf %94, %96 : vector<4x256xf32>
    %c7_69 = arith.constant 7 : index
    %c0_70 = arith.constant 0 : index
    %c0_71 = arith.constant 0 : index
    %98 = vector.load %arg9[%c7_69, %c0_70, %c0_71] : memref<9x4x4xf32, #tpu.memory_space<vmem>>, vector<1x4x4xf32>
    %99 = vector.shape_cast %98 : vector<1x4x4xf32> to vector<4x4xf32>
    %cst_72 = arith.constant dense<0.000000e+00> : vector<4x256xf32>
    %100 = tpu.matmul %99, %97, %cst_72 {dimension_numbers = #tpu.dot_dimension_numbers<[1], [0], [0], [1], [0, 0, 1, 1], [], []>} : vector<4x4xf32>, vector<4x256xf32>, vector<4x256xf32> -> vector<4x256xf32>
    %101 = arith.addf %93, %100 : vector<4x256xf32>
    %c0_73 = arith.constant 0 : index
    %c145 = arith.constant 145 : index
    %102 = vector.load %arg15[%c0_73, %c145] : memref<4x512xf32, #tpu.memory_space<vmem>>, vector<4x256xf32>
    %c8 = arith.constant 8 : index
    %c0_74 = arith.constant 0 : index
    %103 = vector.load %arg2[%c8, %c0_74] : memref<9x256xf32, #tpu.memory_space<vmem>>, vector<1x256xf32>
    %104 = vector.broadcast %103 : vector<1x256xf32> to vector<4x256xf32>
    %105 = arith.mulf %102, %104 : vector<4x256xf32>
    %c8_75 = arith.constant 8 : index
    %c0_76 = arith.constant 0 : index
    %c0_77 = arith.constant 0 : index
    %106 = vector.load %arg9[%c8_75, %c0_76, %c0_77] : memref<9x4x4xf32, #tpu.memory_space<vmem>>, vector<1x4x4xf32>
    %107 = vector.shape_cast %106 : vector<1x4x4xf32> to vector<4x4xf32>
    %cst_78 = arith.constant dense<0.000000e+00> : vector<4x256xf32>
    %108 = tpu.matmul %107, %105, %cst_78 {dimension_numbers = #tpu.dot_dimension_numbers<[1], [0], [0], [1], [0, 0, 1, 1], [], []>} : vector<4x4xf32>, vector<4x256xf32>, vector<4x256xf32> -> vector<4x256xf32>
    %109 = arith.addf %101, %108 : vector<4x256xf32>
    %c0_79 = arith.constant 0 : index
    %c0_80 = arith.constant 0 : index
    %110 = vector.load %arg10[%c0_79, %c0_80] : memref<4x1xf32, #tpu.memory_space<vmem>>, vector<4x1xf32>
    %111 = vector.broadcast %110 : vector<4x1xf32> to vector<4x256xf32>
    %112 = arith.addf %109, %111 : vector<4x256xf32>
    %c0_81 = arith.constant 0 : index
    %c0_82 = arith.constant 0 : index
    %113 = vector.load %arg4[%c0_81, %c0_82] : memref<256x64xf32, #tpu.memory_space<vmem>>, vector<256x64xf32>
    %cst_83 = arith.constant dense<0.000000e+00> : vector<4x64xf32>
    %114 = tpu.matmul %112, %113, %cst_83 {dimension_numbers = #tpu.dot_dimension_numbers<[1], [0], [0], [1], [0, 0, 1, 1], [], []>} : vector<4x256xf32>, vector<256x64xf32>, vector<4x64xf32> -> vector<4x64xf32>
    %c0_84 = arith.constant 0 : index
    %c0_85 = arith.constant 0 : index
    %115 = vector.load %arg7[%c0_84, %c0_85] : memref<4x1xf32, #tpu.memory_space<vmem>>, vector<4x1xf32>
    %c0_86 = arith.constant 0 : index
    %c0_87 = arith.constant 0 : index
    %116 = vector.load %arg8[%c0_86, %c0_87] : memref<4x1xf32, #tpu.memory_space<vmem>>, vector<4x1xf32>
    %cst_88 = arith.constant dense<0.000000e+00> : vector<4xf32>
    %117 = vector.multi_reduction <add>, %114, %cst_88 [1] : vector<4x64xf32> to vector<4xf32>
    %118 = vector.shape_cast %117 : vector<4xf32> to vector<4x1xf32>
    %cst_89 = arith.constant 6.400000e+01 : f32
    %119 = vector.broadcast %cst_89 : f32 to vector<4x1xf32>
    %120 = arith.divf %118, %119 : vector<4x1xf32>
    %121 = arith.mulf %114, %114 : vector<4x64xf32>
    %cst_90 = arith.constant dense<0.000000e+00> : vector<4xf32>
    %122 = vector.multi_reduction <add>, %121, %cst_90 [1] : vector<4x64xf32> to vector<4xf32>
    %123 = vector.shape_cast %122 : vector<4xf32> to vector<4x1xf32>
    %cst_91 = arith.constant 6.400000e+01 : f32
    %124 = vector.broadcast %cst_91 : f32 to vector<4x1xf32>
    %125 = arith.divf %123, %124 : vector<4x1xf32>
    %126 = arith.mulf %120, %120 : vector<4x1xf32>
    %127 = arith.subf %125, %126 : vector<4x1xf32>
    %128 = vector.broadcast %120 : vector<4x1xf32> to vector<4x64xf32>
    %129 = arith.subf %114, %128 : vector<4x64xf32>
    %cst_92 = arith.constant 9.99999974E-6 : f32
    %130 = vector.broadcast %cst_92 : f32 to vector<4x1xf32>
    %131 = arith.addf %127, %130 : vector<4x1xf32>
    %132 = math.rsqrt %131 : vector<4x1xf32>
    %133 = arith.mulf %132, %115 : vector<4x1xf32>
    %134 = vector.broadcast %133 : vector<4x1xf32> to vector<4x64xf32>
    %135 = arith.mulf %129, %134 : vector<4x64xf32>
    %136 = vector.broadcast %116 : vector<4x1xf32> to vector<4x64xf32>
    %137 = arith.addf %135, %136 : vector<4x64xf32>
    %cst_93 = arith.constant 0.000000e+00 : f32
    %138 = vector.broadcast %cst_93 : f32 to vector<4x64xf32>
    %139 = arith.cmpf ogt, %137, %138 : vector<4x64xf32>
    %cst_94 = arith.constant 2.000000e-01 : f32
    %140 = vector.broadcast %cst_94 : f32 to vector<4x64xf32>
    %141 = arith.mulf %140, %137 : vector<4x64xf32>
    %142 = arith.select %139, %137, %141 : vector<4x64xi1>, vector<4x64xf32>
    %cst_95 = arith.constant 0.000000e+00 : f32
    %143 = vector.broadcast %cst_95 : f32 to vector<4x512xf32>
    %c0_96 = arith.constant 0 : index
    %c0_97 = arith.constant 0 : index
    %144 = vector.load %arg15[%c0_96, %c0_97] : memref<4x512xf32, #tpu.memory_space<vmem>>, vector<4x512xf32>
    tpu.vector_store %arg15[%c0_96, %c0_97], %143 {strides = array<i32>} : memref<4x512xf32, #tpu.memory_space<vmem>>, vector<4x512xf32>,
    %c0_98 = arith.constant 0 : index
    %c128_99 = arith.constant 128 : index
    %145 = vector.load %arg15[%c0_98, %c128_99] : memref<4x512xf32, #tpu.memory_space<vmem>>, vector<4x64xf32>
    tpu.vector_store %arg15[%c0_98, %c128_99], %142 {strides = array<i32>} : memref<4x512xf32, #tpu.memory_space<vmem>>, vector<4x64xf32>,
    %cst_100 = arith.constant 0.000000e+00 : f32
    %146 = vector.broadcast %cst_100 : f32 to vector<8x64xf32>
    %c0_101 = arith.constant 0 : index
    %c119 = arith.constant 119 : index
    %147 = vector.load %arg15[%c0_101, %c119] : memref<4x512xf32, #tpu.memory_space<vmem>>, vector<4x64xf32>
    %c0_102 = arith.constant 0 : index
    %c0_103 = arith.constant 0 : index
    %148 = vector.load %arg3[%c0_102, %c0_103] : memref<9x64xf32, #tpu.memory_space<vmem>>, vector<1x64xf32>
    %149 = vector.broadcast %148 : vector<1x64xf32> to vector<4x64xf32>
    %150 = arith.mulf %147, %149 : vector<4x64xf32>
    %c0_104 = arith.constant 0 : index
    %c0_105 = arith.constant 0 : index
    %c0_106 = arith.constant 0 : index
    %151 = vector.load %arg11[%c0_104, %c0_105, %c0_106] : memref<9x8x4xf32, #tpu.memory_space<vmem>>, vector<1x8x4xf32>
    %152 = vector.shape_cast %151 : vector<1x8x4xf32> to vector<8x4xf32>
    %cst_107 = arith.constant dense<0.000000e+00> : vector<8x64xf32>
    %153 = tpu.matmul %152, %150, %cst_107 {dimension_numbers = #tpu.dot_dimension_numbers<[1], [0], [0], [1], [0, 0, 1, 1], [], []>} : vector<8x4xf32>, vector<4x64xf32>, vector<8x64xf32> -> vector<8x64xf32>
    %154 = arith.addf %146, %153 : vector<8x64xf32>
    %c0_108 = arith.constant 0 : index
    %c120 = arith.constant 120 : index
    %155 = vector.load %arg15[%c0_108, %c120] : memref<4x512xf32, #tpu.memory_space<vmem>>, vector<4x64xf32>
    %c1_109 = arith.constant 1 : index
    %c0_110 = arith.constant 0 : index
    %156 = vector.load %arg3[%c1_109, %c0_110] : memref<9x64xf32, #tpu.memory_space<vmem>>, vector<1x64xf32>
    %157 = vector.broadcast %156 : vector<1x64xf32> to vector<4x64xf32>
    %158 = arith.mulf %155, %157 : vector<4x64xf32>
    %c1_111 = arith.constant 1 : index
    %c0_112 = arith.constant 0 : index
    %c0_113 = arith.constant 0 : index
    %159 = vector.load %arg11[%c1_111, %c0_112, %c0_113] : memref<9x8x4xf32, #tpu.memory_space<vmem>>, vector<1x8x4xf32>
    %160 = vector.shape_cast %159 : vector<1x8x4xf32> to vector<8x4xf32>
    %cst_114 = arith.constant dense<0.000000e+00> : vector<8x64xf32>
    %161 = tpu.matmul %160, %158, %cst_114 {dimension_numbers = #tpu.dot_dimension_numbers<[1], [0], [0], [1], [0, 0, 1, 1], [], []>} : vector<8x4xf32>, vector<4x64xf32>, vector<8x64xf32> -> vector<8x64xf32>
    %162 = arith.addf %154, %161 : vector<8x64xf32>
    %c0_115 = arith.constant 0 : index
    %c121 = arith.constant 121 : index
    %163 = vector.load %arg15[%c0_115, %c121] : memref<4x512xf32, #tpu.memory_space<vmem>>, vector<4x64xf32>
    %c2_116 = arith.constant 2 : index
    %c0_117 = arith.constant 0 : index
    %164 = vector.load %arg3[%c2_116, %c0_117] : memref<9x64xf32, #tpu.memory_space<vmem>>, vector<1x64xf32>
    %165 = vector.broadcast %164 : vector<1x64xf32> to vector<4x64xf32>
    %166 = arith.mulf %163, %165 : vector<4x64xf32>
    %c2_118 = arith.constant 2 : index
    %c0_119 = arith.constant 0 : index
    %c0_120 = arith.constant 0 : index
    %167 = vector.load %arg11[%c2_118, %c0_119, %c0_120] : memref<9x8x4xf32, #tpu.memory_space<vmem>>, vector<1x8x4xf32>
    %168 = vector.shape_cast %167 : vector<1x8x4xf32> to vector<8x4xf32>
    %cst_121 = arith.constant dense<0.000000e+00> : vector<8x64xf32>
    %169 = tpu.matmul %168, %166, %cst_121 {dimension_numbers = #tpu.dot_dimension_numbers<[1], [0], [0], [1], [0, 0, 1, 1], [], []>} : vector<8x4xf32>, vector<4x64xf32>, vector<8x64xf32> -> vector<8x64xf32>
    %170 = arith.addf %162, %169 : vector<8x64xf32>
    %c0_122 = arith.constant 0 : index
    %c127_123 = arith.constant 127 : index
    %171 = vector.load %arg15[%c0_122, %c127_123] : memref<4x512xf32, #tpu.memory_space<vmem>>, vector<4x64xf32>
    %c3_124 = arith.constant 3 : index
    %c0_125 = arith.constant 0 : index
    %172 = vector.load %arg3[%c3_124, %c0_125] : memref<9x64xf32, #tpu.memory_space<vmem>>, vector<1x64xf32>
    %173 = vector.broadcast %172 : vector<1x64xf32> to vector<4x64xf32>
    %174 = arith.mulf %171, %173 : vector<4x64xf32>
    %c3_126 = arith.constant 3 : index
    %c0_127 = arith.constant 0 : index
    %c0_128 = arith.constant 0 : index
    %175 = vector.load %arg11[%c3_126, %c0_127, %c0_128] : memref<9x8x4xf32, #tpu.memory_space<vmem>>, vector<1x8x4xf32>
    %176 = vector.shape_cast %175 : vector<1x8x4xf32> to vector<8x4xf32>
    %cst_129 = arith.constant dense<0.000000e+00> : vector<8x64xf32>
    %177 = tpu.matmul %176, %174, %cst_129 {dimension_numbers = #tpu.dot_dimension_numbers<[1], [0], [0], [1], [0, 0, 1, 1], [], []>} : vector<8x4xf32>, vector<4x64xf32>, vector<8x64xf32> -> vector<8x64xf32>
    %178 = arith.addf %170, %177 : vector<8x64xf32>
    %c0_130 = arith.constant 0 : index
    %c128_131 = arith.constant 128 : index
    %179 = vector.load %arg15[%c0_130, %c128_131] : memref<4x512xf32, #tpu.memory_space<vmem>>, vector<4x64xf32>
    %c4_132 = arith.constant 4 : index
    %c0_133 = arith.constant 0 : index
    %180 = vector.load %arg3[%c4_132, %c0_133] : memref<9x64xf32, #tpu.memory_space<vmem>>, vector<1x64xf32>
    %181 = vector.broadcast %180 : vector<1x64xf32> to vector<4x64xf32>
    %182 = arith.mulf %179, %181 : vector<4x64xf32>
    %c4_134 = arith.constant 4 : index
    %c0_135 = arith.constant 0 : index
    %c0_136 = arith.constant 0 : index
    %183 = vector.load %arg11[%c4_134, %c0_135, %c0_136] : memref<9x8x4xf32, #tpu.memory_space<vmem>>, vector<1x8x4xf32>
    %184 = vector.shape_cast %183 : vector<1x8x4xf32> to vector<8x4xf32>
    %cst_137 = arith.constant dense<0.000000e+00> : vector<8x64xf32>
    %185 = tpu.matmul %184, %182, %cst_137 {dimension_numbers = #tpu.dot_dimension_numbers<[1], [0], [0], [1], [0, 0, 1, 1], [], []>} : vector<8x4xf32>, vector<4x64xf32>, vector<8x64xf32> -> vector<8x64xf32>
    %186 = arith.addf %178, %185 : vector<8x64xf32>
    %c0_138 = arith.constant 0 : index
    %c129_139 = arith.constant 129 : index
    %187 = vector.load %arg15[%c0_138, %c129_139] : memref<4x512xf32, #tpu.memory_space<vmem>>, vector<4x64xf32>
    %c5_140 = arith.constant 5 : index
    %c0_141 = arith.constant 0 : index
    %188 = vector.load %arg3[%c5_140, %c0_141] : memref<9x64xf32, #tpu.memory_space<vmem>>, vector<1x64xf32>
    %189 = vector.broadcast %188 : vector<1x64xf32> to vector<4x64xf32>
    %190 = arith.mulf %187, %189 : vector<4x64xf32>
    %c5_142 = arith.constant 5 : index
    %c0_143 = arith.constant 0 : index
    %c0_144 = arith.constant 0 : index
    %191 = vector.load %arg11[%c5_142, %c0_143, %c0_144] : memref<9x8x4xf32, #tpu.memory_space<vmem>>, vector<1x8x4xf32>
    %192 = vector.shape_cast %191 : vector<1x8x4xf32> to vector<8x4xf32>
    %cst_145 = arith.constant dense<0.000000e+00> : vector<8x64xf32>
    %193 = tpu.matmul %192, %190, %cst_145 {dimension_numbers = #tpu.dot_dimension_numbers<[1], [0], [0], [1], [0, 0, 1, 1], [], []>} : vector<8x4xf32>, vector<4x64xf32>, vector<8x64xf32> -> vector<8x64xf32>
    %194 = arith.addf %186, %193 : vector<8x64xf32>
    %c0_146 = arith.constant 0 : index
    %c135 = arith.constant 135 : index
    %195 = vector.load %arg15[%c0_146, %c135] : memref<4x512xf32, #tpu.memory_space<vmem>>, vector<4x64xf32>
    %c6_147 = arith.constant 6 : index
    %c0_148 = arith.constant 0 : index
    %196 = vector.load %arg3[%c6_147, %c0_148] : memref<9x64xf32, #tpu.memory_space<vmem>>, vector<1x64xf32>
    %197 = vector.broadcast %196 : vector<1x64xf32> to vector<4x64xf32>
    %198 = arith.mulf %195, %197 : vector<4x64xf32>
    %c6_149 = arith.constant 6 : index
    %c0_150 = arith.constant 0 : index
    %c0_151 = arith.constant 0 : index
    %199 = vector.load %arg11[%c6_149, %c0_150, %c0_151] : memref<9x8x4xf32, #tpu.memory_space<vmem>>, vector<1x8x4xf32>
    %200 = vector.shape_cast %199 : vector<1x8x4xf32> to vector<8x4xf32>
    %cst_152 = arith.constant dense<0.000000e+00> : vector<8x64xf32>
    %201 = tpu.matmul %200, %198, %cst_152 {dimension_numbers = #tpu.dot_dimension_numbers<[1], [0], [0], [1], [0, 0, 1, 1], [], []>} : vector<8x4xf32>, vector<4x64xf32>, vector<8x64xf32> -> vector<8x64xf32>
    %202 = arith.addf %194, %201 : vector<8x64xf32>
    %c0_153 = arith.constant 0 : index
    %c136 = arith.constant 136 : index
    %203 = vector.load %arg15[%c0_153, %c136] : memref<4x512xf32, #tpu.memory_space<vmem>>, vector<4x64xf32>
    %c7_154 = arith.constant 7 : index
    %c0_155 = arith.constant 0 : index
    %204 = vector.load %arg3[%c7_154, %c0_155] : memref<9x64xf32, #tpu.memory_space<vmem>>, vector<1x64xf32>
    %205 = vector.broadcast %204 : vector<1x64xf32> to vector<4x64xf32>
    %206 = arith.mulf %203, %205 : vector<4x64xf32>
    %c7_156 = arith.constant 7 : index
    %c0_157 = arith.constant 0 : index
    %c0_158 = arith.constant 0 : index
    %207 = vector.load %arg11[%c7_156, %c0_157, %c0_158] : memref<9x8x4xf32, #tpu.memory_space<vmem>>, vector<1x8x4xf32>
    %208 = vector.shape_cast %207 : vector<1x8x4xf32> to vector<8x4xf32>
    %cst_159 = arith.constant dense<0.000000e+00> : vector<8x64xf32>
    %209 = tpu.matmul %208, %206, %cst_159 {dimension_numbers = #tpu.dot_dimension_numbers<[1], [0], [0], [1], [0, 0, 1, 1], [], []>} : vector<8x4xf32>, vector<4x64xf32>, vector<8x64xf32> -> vector<8x64xf32>
    %210 = arith.addf %202, %209 : vector<8x64xf32>
    %c0_160 = arith.constant 0 : index
    %c137 = arith.constant 137 : index
    %211 = vector.load %arg15[%c0_160, %c137] : memref<4x512xf32, #tpu.memory_space<vmem>>, vector<4x64xf32>
    %c8_161 = arith.constant 8 : index
    %c0_162 = arith.constant 0 : index
    %212 = vector.load %arg3[%c8_161, %c0_162] : memref<9x64xf32, #tpu.memory_space<vmem>>, vector<1x64xf32>
    %213 = vector.broadcast %212 : vector<1x64xf32> to vector<4x64xf32>
    %214 = arith.mulf %211, %213 : vector<4x64xf32>
    %c8_163 = arith.constant 8 : index
    %c0_164 = arith.constant 0 : index
    %c0_165 = arith.constant 0 : index
    %215 = vector.load %arg11[%c8_163, %c0_164, %c0_165] : memref<9x8x4xf32, #tpu.memory_space<vmem>>, vector<1x8x4xf32>
    %216 = vector.shape_cast %215 : vector<1x8x4xf32> to vector<8x4xf32>
    %cst_166 = arith.constant dense<0.000000e+00> : vector<8x64xf32>
    %217 = tpu.matmul %216, %214, %cst_166 {dimension_numbers = #tpu.dot_dimension_numbers<[1], [0], [0], [1], [0, 0, 1, 1], [], []>} : vector<8x4xf32>, vector<4x64xf32>, vector<8x64xf32> -> vector<8x64xf32>
    %218 = arith.addf %210, %217 : vector<8x64xf32>
    %c0_167 = arith.constant 0 : index
    %c0_168 = arith.constant 0 : index
    %219 = vector.load %arg12[%c0_167, %c0_168] : memref<8x1xf32, #tpu.memory_space<vmem>>, vector<8x1xf32>
    %220 = vector.broadcast %219 : vector<8x1xf32> to vector<8x64xf32>
    %221 = arith.addf %218, %220 : vector<8x64xf32>
    %222 = arith.addf %5, %221 : vector<8x64xf32>
    %cst_169 = arith.constant 0.707106769 : f32
    %223 = vector.broadcast %cst_169 : f32 to vector<8x64xf32>
    %224 = arith.mulf %222, %223 : vector<8x64xf32>
    %c0_170 = arith.constant 0 : index
    %c0_171 = arith.constant 0 : index
    %c0_172 = arith.constant 0 : index
    %225 = vector.load %arg14[%c0_170, %c0_171, %c0_172] : memref<1x8x64xf32, #tpu.memory_space<vmem>>, vector<1x8x64xf32>
    %226 = vector.shape_cast %225 : vector<1x8x64xf32> to vector<8x64xf32>
    %227 = vector.shape_cast %224 : vector<8x64xf32> to vector<1x8x64xf32>
    tpu.vector_store %arg14[%c0_170, %c0_171, %c0_172], %227 {strides = array<i32>} : memref<1x8x64xf32, #tpu.memory_space<vmem>>, vector<1x8x64xf32>,
    return
  }
  func.func @transform_0(%arg0: i32) -> (i32, i32, i32) {
    %c0_i32 = arith.constant 0 : i32
    %c0_i32_0 = arith.constant 0 : i32
    %c0_i32_1 = arith.constant 0 : i32
    return %arg0, %c0_i32, %c0_i32_0 : i32, i32, i32
  }
  func.func @transform_1(%arg0: i32) -> (i32, i32) {
    %c0_i32 = arith.constant 0 : i32
    %c0_i32_0 = arith.constant 0 : i32
    %c0_i32_1 = arith.constant 0 : i32
    return %c0_i32, %c0_i32_0 : i32, i32
  }
  func.func @transform_2(%arg0: i32) -> (i32, i32) {
    %c0_i32 = arith.constant 0 : i32
    %c0_i32_0 = arith.constant 0 : i32
    %c0_i32_1 = arith.constant 0 : i32
    return %c0_i32, %c0_i32_0 : i32, i32
  }
  func.func @transform_3(%arg0: i32) -> (i32, i32) {
    %c0_i32 = arith.constant 0 : i32
    %c0_i32_0 = arith.constant 0 : i32
    %c0_i32_1 = arith.constant 0 : i32
    return %c0_i32, %c0_i32_0 : i32, i32
  }
  func.func @transform_4(%arg0: i32) -> (i32, i32) {
    %c0_i32 = arith.constant 0 : i32
    %c0_i32_0 = arith.constant 0 : i32
    %c0_i32_1 = arith.constant 0 : i32
    return %c0_i32, %c0_i32_0 : i32, i32
  }
  func.func @transform_5(%arg0: i32) -> (i32, i32) {
    %c0_i32 = arith.constant 0 : i32
    %c0_i32_0 = arith.constant 0 : i32
    %c0_i32_1 = arith.constant 0 : i32
    return %c0_i32, %c0_i32_0 : i32, i32
  }
  func.func @transform_6(%arg0: i32) -> (i32, i32) {
    %c0_i32 = arith.constant 0 : i32
    %c0_i32_0 = arith.constant 0 : i32
    %c0_i32_1 = arith.constant 0 : i32
    return %c0_i32, %c0_i32_0 : i32, i32
  }
  func.func @transform_7(%arg0: i32) -> (i32, i32) {
    %c0_i32 = arith.constant 0 : i32
    %c0_i32_0 = arith.constant 0 : i32
    %c0_i32_1 = arith.constant 0 : i32
    return %c0_i32, %c0_i32_0 : i32, i32
  }
  func.func @transform_8(%arg0: i32) -> (i32, i32, i32) {
    %c0_i32 = arith.constant 0 : i32
    %c0_i32_0 = arith.constant 0 : i32
    %c0_i32_1 = arith.constant 0 : i32
    %c0_i32_2 = arith.constant 0 : i32
    return %c0_i32, %c0_i32_0, %c0_i32_1 : i32, i32, i32
  }
  func.func @transform_9(%arg0: i32) -> (i32, i32) {
    %c0_i32 = arith.constant 0 : i32
    %c0_i32_0 = arith.constant 0 : i32
    %c0_i32_1 = arith.constant 0 : i32
    return %c0_i32, %c0_i32_0 : i32, i32
  }
  func.func @transform_10(%arg0: i32) -> (i32, i32, i32) {
    %c0_i32 = arith.constant 0 : i32
    %c0_i32_0 = arith.constant 0 : i32
    %c0_i32_1 = arith.constant 0 : i32
    %c0_i32_2 = arith.constant 0 : i32
    return %c0_i32, %c0_i32_0, %c0_i32_1 : i32, i32, i32
  }
  func.func @transform_11(%arg0: i32) -> (i32, i32) {
    %c0_i32 = arith.constant 0 : i32
    %c0_i32_0 = arith.constant 0 : i32
    %c0_i32_1 = arith.constant 0 : i32
    return %c0_i32, %c0_i32_0 : i32, i32
  }
  func.func @transform_12(%arg0: i32) -> (i32, i32) {
    %c0_i32 = arith.constant 0 : i32
    %c0_i32_0 = arith.constant 0 : i32
    %c0_i32_1 = arith.constant 0 : i32
    return %c0_i32, %c0_i32_0 : i32, i32
  }
  func.func @transform_13(%arg0: i32) -> (i32, i32, i32) {
    %c0_i32 = arith.constant 0 : i32
    %c0_i32_0 = arith.constant 0 : i32
    %c0_i32_1 = arith.constant 0 : i32
    return %arg0, %c0_i32, %c0_i32_0 : i32, i32, i32
  }
}

</mosaic_0001>

<llo_original>
// kernel: tpu_custom_call.1
$region0: #{tpu_custom_call.1}
  #allocation0 [shape = 'u32[]', space=smem, size = 0x4, offset = 0x4, fixed_abs, tag = 'smem constant byte address 0x4 - core index']
  #allocation1 [shape = 'u32[72,128]{1,0:T(1,128)}', space=vmem, size = 0x9000, scoped, tag = 'internal scratch']
  #allocation2 [shape = 'f32[4,512]{1,0:T(4,128)}', space=vmem, size = 0x2000, scoped, tag = 'scratch operand']
  %s0 = inlined_call_operand.vmem [shape: f32[2,4,256], index: 0, kind: input, shape index: {}]
  %s1 = inlined_call_operand.vmem [shape: f32[9,256], index: 1, kind: input, shape index: {}]
  %s2 = inlined_call_operand.vmem [shape: f32[9,64], index: 2, kind: input, shape index: {}]
  %s3 = inlined_call_operand.vmem [shape: f32[256,64], index: 3, kind: input, shape index: {}]
  %s4 = inlined_call_operand.vmem [shape: f32[4,1], index: 4, kind: input, shape index: {}]
  %s5 = inlined_call_operand.vmem [shape: f32[4,1], index: 5, kind: input, shape index: {}]
  %s6 = inlined_call_operand.vmem [shape: f32[4,1], index: 6, kind: input, shape index: {}]
  %s7 = inlined_call_operand.vmem [shape: f32[4,1], index: 7, kind: input, shape index: {}]
  %s8 = inlined_call_operand.vmem [shape: f32[9,4,4], index: 8, kind: input, shape index: {}]
  %s9 = inlined_call_operand.vmem [shape: f32[4,1], index: 9, kind: input, shape index: {}]
  %s10 = inlined_call_operand.vmem [shape: f32[9,8,4], index: 10, kind: input, shape index: {}]
  %s11 = inlined_call_operand.vmem [shape: f32[8,1], index: 11, kind: input, shape index: {}]
  %s12 = inlined_call_operand.vmem [shape: f32[8,4], index: 12, kind: input, shape index: {}]
  %s13 = inlined_call_operand.hbm [shape: f32[2,8,64], index: 13, kind: output, shape index: {}]
  %s14 = sld [smem:[#allocation0]]
  $region85: #{tpu_custom_call.1} parent=0
    _
  %s16 = ssub.s32 1, %s14
  %s17 = scalar_select 0, %s16, %s14
  $region1: #{tpu_custom_call.1} parent=0
    #allocation3 [shape = 'u8[8192]{0}', space=vmem, size = 0x2000, scoped, tag = 'output window, operand 0']
    #allocation4 [shape = 's32[2]{0}', space=sflag, size = 0x8, scoped, tag = 'scoped memory for tpu_custom_call.1']
    %18 = vsyncpa [#allocation4], 0
    %s19 = scalar_lea.sflag [#allocation4], 1
    %20 = vsyncpa %s19, 0
    loop: start=0, step=1, limit=4
    $region2: #{tpu_custom_call.1} parent=1 // loop_pre_header
      _
    $region3: #{tpu_custom_call.1} parent=1 // loop_header
      %s22 = sphi 0, %s26
      %p23 = scmp.ge.s32.totalorder %s22, 4
      %s32 = sphi 0, %s34
      %s35 = sphi 0, %s32
      %s36 = sphi 0, %s35
      %s52 = sphi 0, %s36
      %s56 = sphi 0, %s56
      %s58 = sphi 0, %s56
      %s59 = sphi 0, %s58
      %s73 = sphi 0, %s59
      %s77 = sphi 0, %s77
      %s79 = sphi 0, %s77
      %s80 = sphi 0, %s79
      %s94 = sphi 0, %s80
      %s98 = sphi 0, %s98
      %s100 = sphi 0, %s98
      %s101 = sphi 0, %s100
      %s115 = sphi 0, %s101
      %s119 = sphi 0, %s119
      %s121 = sphi 0, %s119
      %s122 = sphi 0, %s121
      %s136 = sphi 0, %s122
      %s140 = sphi 0, %s140
      %s142 = sphi 0, %s140
      %s143 = sphi 0, %s142
      %s157 = sphi 0, %s143
      %s161 = sphi 0, %s161
      %s163 = sphi 0, %s161
      %s164 = sphi 0, %s163
      %s178 = sphi 0, %s164
      %s182 = sphi 0, %s182
      %s184 = sphi 0, %s182
      %s185 = sphi 0, %s184
      %s199 = sphi 0, %s185
      %s203 = sphi 0, %s203
      %s205 = sphi 0, %s203
      %s206 = sphi 0, %s205
      %s220 = sphi 0, %s206
      %s224 = sphi 0, %s224
      %s226 = sphi 0, %s224
      %s227 = sphi 0, %s226
      %s241 = sphi 0, %s227
      %s245 = sphi 0, %s245
      %s247 = sphi 0, %s245
      %s248 = sphi 0, %s247
      %s262 = sphi 0, %s248
      %s266 = sphi 0, %s266
      %s268 = sphi 0, %s266
      %s269 = sphi 0, %s268
      %s283 = sphi 0, %s269
      %s287 = sphi 0, %s287
      %s289 = sphi 0, %s287
      %s290 = sphi 0, %s289
      %s304 = sphi 0, %s290
      %s310 = sphi 0, %s312
      %s313 = sphi 0, %s310
      %s314 = sphi 0, %s313
      %s330 = sphi 0, %s314
    $region4: #{tpu_custom_call.1} parent=1 // loop_header_branch
      %25 = sbr.rel (%p23) target = $region8
    $region5: #{tpu_custom_call.1} parent=1 // loop_body
      %s27 = ssub.s32 %s22, 1
      %s28 = ssub.s32 %s22, 2
      %s29 = sadd.s32 %s22, 1
      %s30 = ssub.s32 %s22, %s29
      %p31 = scmp.eq.s32.totalorder %s30, 0
      %s33 = sadd.s32 %s32, 1
      %s34 = scalar_select %p31, %s32, %s33
      %p37 = pneg %p31
      %p38 = scmp.eq.s32.totalorder %s22, 1
      %p39 = por %p37, %p38
      %p40 = scmp.ne.s32.totalorder %s32, %s35
      %p41 = scmp.eq.s32.totalorder %s22, 0
      %p42 = por %p40, %p41
      %p43 = scmp.ne.s32.totalorder %s32, %s35
      %p44 = scmp.eq.s32.totalorder %s27, 1
      %p45 = por %p43, %p44
      %p46 = scmp.ne.s32.totalorder %s35, %s36
      %p47 = scmp.eq.s32.totalorder %s27, 0
      %p48 = por %p46, %p47
      %p49 = scmp.ne.s32.totalorder %s35, %s36
      %p50 = scmp.eq.s32.totalorder %s28, 1
      %p51 = por %p49, %p50
      %p53 = scmp.ne.s32.totalorder %s36, %s52
      %p54 = scmp.eq.s32.totalorder %s28, 0
      %p55 = por %p53, %p54
      %s57 = sadd.s32 %s56, 1
      %p60 = scmp.eq.s32.totalorder %s22, 1
      %p61 = scmp.ne.s32.totalorder %s56, %s58
      %p62 = scmp.eq.s32.totalorder %s22, 0
      %p63 = por %p61, %p62
      %p64 = scmp.ne.s32.totalorder %s56, %s58
      %p65 = scmp.eq.s32.totalorder %s27, 1
      %p66 = por %p64, %p65
      %p67 = scmp.ne.s32.totalorder %s58, %s59
      %p68 = scmp.eq.s32.totalorder %s27, 0
      %p69 = por %p67, %p68
      %p70 = scmp.ne.s32.totalorder %s58, %s59
      %p71 = scmp.eq.s32.totalorder %s28, 1
      %p72 = por %p70, %p71
      %p74 = scmp.ne.s32.totalorder %s59, %s73
      %p75 = scmp.eq.s32.totalorder %s28, 0
      %p76 = por %p74, %p75
      %s78 = sadd.s32 %s77, 1
      %p81 = scmp.eq.s32.totalorder %s22, 1
      %p82 = scmp.ne.s32.totalorder %s77, %s79
      %p83 = scmp.eq.s32.totalorder %s22, 0
      %p84 = por %p82, %p83
      %p85 = scmp.ne.s32.totalorder %s77, %s79
      %p86 = scmp.eq.s32.totalorder %s27, 1
      %p87 = por %p85, %p86
      %p88 = scmp.ne.s32.totalorder %s79, %s80
      %p89 = scmp.eq.s32.totalorder %s27, 0
      %p90 = por %p88, %p89
      %p91 = scmp.ne.s32.totalorder %s79, %s80
      %p92 = scmp.eq.s32.totalorder %s28, 1
      %p93 = por %p91, %p92
      %p95 = scmp.ne.s32.totalorder %s80, %s94
      %p96 = scmp.eq.s32.totalorder %s28, 0
      %p97 = por %p95, %p96
      %s99 = sadd.s32 %s98, 1
      %p102 = scmp.eq.s32.totalorder %s22, 1
      %p103 = scmp.ne.s32.totalorder %s98, %s100
      %p104 = scmp.eq.s32.totalorder %s22, 0
      %p105 = por %p103, %p104
      %p106 = scmp.ne.s32.totalorder %s98, %s100
      %p107 = scmp.eq.s32.totalorder %s27, 1
      %p108 = por %p106, %p107
      %p109 = scmp.ne.s32.totalorder %s100, %s101
      %p110 = scmp.eq.s32.totalorder %s27, 0
      %p111 = por %p109, %p110
      %p112 = scmp.ne.s32.totalorder %s100, %s101
      %p113 = scmp.eq.s32.totalorder %s28, 1
      %p114 = por %p112, %p113
      %p116 = scmp.ne.s32.totalorder %s101, %s115
      %p117 = scmp.eq.s32.totalorder %s28, 0
      %p118 = por %p116, %p117
      %s120 = sadd.s32 %s119, 1
      %p123 = scmp.eq.s32.totalorder %s22, 1
      %p124 = scmp.ne.s32.totalorder %s119, %s121
      %p125 = scmp.eq.s32.totalorder %s22, 0
      %p126 = por %p124, %p125
      %p127 = scmp.ne.s32.totalorder %s119, %s121
      %p128 = scmp.eq.s32.totalorder %s27, 1
      %p129 = por %p127, %p128
      %p130 = scmp.ne.s32.totalorder %s121, %s122
      %p131 = scmp.eq.s32.totalorder %s27, 0
      %p132 = por %p130, %p131
      %p133 = scmp.ne.s32.totalorder %s121, %s122
      %p134 = scmp.eq.s32.totalorder %s28, 1
      %p135 = por %p133, %p134
      %p137 = scmp.ne.s32.totalorder %s122, %s136
      %p138 = scmp.eq.s32.totalorder %s28, 0
      %p139 = por %p137, %p138
      %s141 = sadd.s32 %s140, 1
      %p144 = scmp.eq.s32.totalorder %s22, 1
      %p145 = scmp.ne.s32.totalorder %s140, %s142
      %p146 = scmp.eq.s32.totalorder %s22, 0
      %p147 = por %p145, %p146
      %p148 = scmp.ne.s32.totalorder %s140, %s142
      %p149 = scmp.eq.s32.totalorder %s27, 1
      %p150 = por %p148, %p149
      %p151 = scmp.ne.s32.totalorder %s142, %s143
      %p152 = scmp.eq.s32.totalorder %s27, 0
      %p153 = por %p151, %p152
      %p154 = scmp.ne.s32.totalorder %s142, %s143
      %p155 = scmp.eq.s32.totalorder %s28, 1
      %p156 = por %p154, %p155
      %p158 = scmp.ne.s32.totalorder %s143, %s157
      %p159 = scmp.eq.s32.totalorder %s28, 0
      %p160 = por %p158, %p159
      %s162 = sadd.s32 %s161, 1
      %p165 = scmp.eq.s32.totalorder %s22, 1
      %p166 = scmp.ne.s32.totalorder %s161, %s163
      %p167 = scmp.eq.s32.totalorder %s22, 0
      %p168 = por %p166, %p167
      %p169 = scmp.ne.s32.totalorder %s161, %s163
      %p170 = scmp.eq.s32.totalorder %s27, 1
      %p171 = por %p169, %p170
      %p172 = scmp.ne.s32.totalorder %s163, %s164
      %p173 = scmp.eq.s32.totalorder %s27, 0
      %p174 = por %p172, %p173
      %p175 = scmp.ne.s32.totalorder %s163, %s164
      %p176 = scmp.eq.s32.totalorder %s28, 1
      %p177 = por %p175, %p176
      %p179 = scmp.ne.s32.totalorder %s164, %s178
      %p180 = scmp.eq.s32.totalorder %s28, 0
      %p181 = por %p179, %p180
      %s183 = sadd.s32 %s182, 1
      %p186 = scmp.eq.s32.totalorder %s22, 1
      %p187 = scmp.ne.s32.totalorder %s182, %s184
      %p188 = scmp.eq.s32.totalorder %s22, 0
      %p189 = por %p187, %p188
      %p190 = scmp.ne.s32.totalorder %s182, %s184
      %p191 = scmp.eq.s32.totalorder %s27, 1
      %p192 = por %p190, %p191
      %p193 = scmp.ne.s32.totalorder %s184, %s185
      %p194 = scmp.eq.s32.totalorder %s27, 0
      %p195 = por %p193, %p194
      %p196 = scmp.ne.s32.totalorder %s184, %s185
      %p197 = scmp.eq.s32.totalorder %s28, 1
      %p198 = por %p196, %p197
      %p200 = scmp.ne.s32.totalorder %s185, %s199
      %p201 = scmp.eq.s32.totalorder %s28, 0
      %p202 = por %p200, %p201
      %s204 = sadd.s32 %s203, 1
      %p207 = scmp.eq.s32.totalorder %s22, 1
      %p208 = scmp.ne.s32.totalorder %s203, %s205
      %p209 = scmp.eq.s32.totalorder %s22, 0
      %p210 = por %p208, %p209
      %p211 = scmp.ne.s32.totalorder %s203, %s205
      %p212 = scmp.eq.s32.totalorder %s27, 1
      %p213 = por %p211, %p212
      %p214 = scmp.ne.s32.totalorder %s205, %s206
      %p215 = scmp.eq.s32.totalorder %s27, 0
      %p216 = por %p214, %p215
      %p217 = scmp.ne.s32.totalorder %s205, %s206
      %p218 = scmp.eq.s32.totalorder %s28, 1
      %p219 = por %p217, %p218
      %p221 = scmp.ne.s32.totalorder %s206, %s220
      %p222 = scmp.eq.s32.totalorder %s28, 0
      %p223 = por %p221, %p222
      %s225 = sadd.s32 %s224, 1
      %p228 = scmp.eq.s32.totalorder %s22, 1
      %p229 = scmp.ne.s32.totalorder %s224, %s226
      %p230 = scmp.eq.s32.totalorder %s22, 0
      %p231 = por %p229, %p230
      %p232 = scmp.ne.s32.totalorder %s224, %s226
      %p233 = scmp.eq.s32.totalorder %s27, 1
      %p234 = por %p232, %p233
      %p235 = scmp.ne.s32.totalorder %s226, %s227
      %p236 = scmp.eq.s32.totalorder %s27, 0
      %p237 = por %p235, %p236
      %p238 = scmp.ne.s32.totalorder %s226, %s227
      %p239 = scmp.eq.s32.totalorder %s28, 1
      %p240 = por %p238, %p239
      %p242 = scmp.ne.s32.totalorder %s227, %s241
      %p243 = scmp.eq.s32.totalorder %s28, 0
      %p244 = por %p242, %p243
      %s246 = sadd.s32 %s245, 1
      %p249 = scmp.eq.s32.totalorder %s22, 1
      %p250 = scmp.ne.s32.totalorder %s245, %s247
      %p251 = scmp.eq.s32.totalorder %s22, 0
      %p252 = por %p250, %p251
      %p253 = scmp.ne.s32.totalorder %s245, %s247
      %p254 = scmp.eq.s32.totalorder %s27, 1
      %p255 = por %p253, %p254
      %p256 = scmp.ne.s32.totalorder %s247, %s248
      %p257 = scmp.eq.s32.totalorder %s27, 0
      %p258 = por %p256, %p257
      %p259 = scmp.ne.s32.totalorder %s247, %s248
      %p260 = scmp.eq.s32.totalorder %s28, 1
      %p261 = por %p259, %p260
      %p263 = scmp.ne.s32.totalorder %s248, %s262
      %p264 = scmp.eq.s32.totalorder %s28, 0
      %p265 = por %p263, %p264
      %s267 = sadd.s32 %s266, 1
      %p270 = scmp.eq.s32.totalorder %s22, 1
      %p271 = scmp.ne.s32.totalorder %s266, %s268
      %p272 = scmp.eq.s32.totalorder %s22, 0
      %p273 = por %p271, %p272
      %p274 = scmp.ne.s32.totalorder %s266, %s268
      %p275 = scmp.eq.s32.totalorder %s27, 1
      %p276 = por %p274, %p275
      %p277 = scmp.ne.s32.totalorder %s268, %s269
      %p278 = scmp.eq.s32.totalorder %s27, 0
      %p279 = por %p277, %p278
      %p280 = scmp.ne.s32.totalorder %s268, %s269
      %p281 = scmp.eq.s32.totalorder %s28, 1
      %p282 = por %p280, %p281
      %p284 = scmp.ne.s32.totalorder %s269, %s283
      %p285 = scmp.eq.s32.totalorder %s28, 0
      %p286 = por %p284, %p285
      %s288 = sadd.s32 %s287, 1
      %p291 = scmp.eq.s32.totalorder %s22, 1
      %p292 = scmp.ne.s32.totalorder %s287, %s289
      %p293 = scmp.eq.s32.totalorder %s22, 0
      %p294 = por %p292, %p293
      %p295 = scmp.ne.s32.totalorder %s287, %s289
      %p296 = scmp.eq.s32.totalorder %s27, 1
      %p297 = por %p295, %p296
      %p298 = scmp.ne.s32.totalorder %s289, %s290
      %p299 = scmp.eq.s32.totalorder %s27, 0
      %p300 = por %p298, %p299
      %p301 = scmp.ne.s32.totalorder %s289, %s290
      %p302 = scmp.eq.s32.totalorder %s28, 1
      %p303 = por %p301, %p302
      %p305 = scmp.ne.s32.totalorder %s290, %s304
      %p306 = scmp.eq.s32.totalorder %s28, 0
      %p307 = por %p305, %p306
      %s308 = ssub.s32 %s22, %s29
      %p309 = scmp.eq.s32.totalorder %s308, 0
      %s311 = sadd.s32 %s310, 1
      %s312 = scalar_select %p309, %s310, %s311
      %p315 = pneg %p309
      %p316 = scmp.eq.s32.totalorder %s22, 1
      %p317 = por %p315, %p316
      %p318 = scmp.ne.s32.totalorder %s310, %s313
      %p319 = scmp.eq.s32.totalorder %s22, 0
      %p320 = por %p318, %p319
      %p321 = scmp.ne.s32.totalorder %s310, %s313
      %p322 = scmp.eq.s32.totalorder %s27, 1
      %p323 = por %p321, %p322
      %p324 = scmp.ne.s32.totalorder %s313, %s314
      %p325 = scmp.eq.s32.totalorder %s27, 0
      %p326 = por %p324, %p325
      %p327 = scmp.ne.s32.totalorder %s313, %s314
      %p328 = scmp.eq.s32.totalorder %s28, 1
      %p329 = por %p327, %p328
      %p331 = scmp.ne.s32.totalorder %s314, %s330
      %p332 = scmp.eq.s32.totalorder %s28, 0
      %p333 = por %p331, %p332
      %p334 = scmp.le.s32.totalorder 1, %s22
      %p335 = scmp.lt.s32.totalorder %s22, 3
      %p336 = pnand %p334, %p335
      %p337 = pneg %p336
      // Predicated region
      $region9: #{tpu_custom_call.1} parent=5 // pred_check
        _
      $region10: #{tpu_custom_call.1} parent=5 // pred_check_branch
        %339 = sbr.rel (%p336) target = $region12
      $region11: #{tpu_custom_call.1} parent=5 // pred_region
        %s340 = ssub.s32 %s22, 1
        // Predicated region
        $region13: #{tpu_custom_call.1} parent=11 // pred_check
          %p341 = pneg %p69
        $region14: #{tpu_custom_call.1} parent=11 // pred_check_branch
          %343 = sbr.rel (%p341) target = $region16
        $region15: #{tpu_custom_call.1} parent=11 // pred_region
          _
        $region16: #{tpu_custom_call.1} parent=11 // pred_fallthru
          _
        // Predicated region
        $region17: #{tpu_custom_call.1} parent=11 // pred_check
          %p344 = pneg %p90
        $region18: #{tpu_custom_call.1} parent=11 // pred_check_branch
          %346 = sbr.rel (%p344) target = $region20
        $region19: #{tpu_custom_call.1} parent=11 // pred_region
          _
        $region20: #{tpu_custom_call.1} parent=11 // pred_fallthru
          _
        // Predicated region
        $region21: #{tpu_custom_call.1} parent=11 // pred_check
          %p347 = pneg %p111
        $region22: #{tpu_custom_call.1} parent=11 // pred_check_branch
          %349 = sbr.rel (%p347) target = $region24
        $region23: #{tpu_custom_call.1} parent=11 // pred_region
          _
        $region24: #{tpu_custom_call.1} parent=11 // pred_fallthru
          _
        // Predicated region
        $region25: #{tpu_custom_call.1} parent=11 // pred_check
          %p350 = pneg %p132
        $region26: #{tpu_custom_call.1} parent=11 // pred_check_branch
          %352 = sbr.rel (%p350) target = $region28
        $region27: #{tpu_custom_call.1} parent=11 // pred_region
          _
        $region28: #{tpu_custom_call.1} parent=11 // pred_fallthru
          _
        // Predicated region
        $region29: #{tpu_custom_call.1} parent=11 // pred_check
          %p353 = pneg %p153
        $region30: #{tpu_custom_call.1} parent=11 // pred_check_branch
          %355 = sbr.rel (%p353) target = $region32
        $region31: #{tpu_custom_call.1} parent=11 // pred_region
          _
        $region32: #{tpu_custom_call.1} parent=11 // pred_fallthru
          _
        // Predicated region
        $region33: #{tpu_custom_call.1} parent=11 // pred_check
          %p356 = pneg %p174
        $region34: #{tpu_custom_call.1} parent=11 // pred_check_branch
          %358 = sbr.rel (%p356) target = $region36
        $region35: #{tpu_custom_call.1} parent=11 // pred_region
          _
        $region36: #{tpu_custom_call.1} parent=11 // pred_fallthru
          _
        // Predicated region
        $region37: #{tpu_custom_call.1} parent=11 // pred_check
          %p359 = pneg %p195
        $region38: #{tpu_custom_call.1} parent=11 // pred_check_branch
          %361 = sbr.rel (%p359) target = $region40
        $region39: #{tpu_custom_call.1} parent=11 // pred_region
          _
        $region40: #{tpu_custom_call.1} parent=11 // pred_fallthru
          _
        // Predicated region
        $region41: #{tpu_custom_call.1} parent=11 // pred_check
          %p362 = pneg %p216
        $region42: #{tpu_custom_call.1} parent=11 // pred_check_branch
          %364 = sbr.rel (%p362) target = $region44
        $region43: #{tpu_custom_call.1} parent=11 // pred_region
          _
        $region44: #{tpu_custom_call.1} parent=11 // pred_fallthru
          _
        // Predicated region
        $region45: #{tpu_custom_call.1} parent=11 // pred_check
          %p365 = pneg %p237
        $region46: #{tpu_custom_call.1} parent=11 // pred_check_branch
          %367 = sbr.rel (%p365) target = $region48
        $region47: #{tpu_custom_call.1} parent=11 // pred_region
          _
        $region48: #{tpu_custom_call.1} parent=11 // pred_fallthru
          _
        // Predicated region
        $region49: #{tpu_custom_call.1} parent=11 // pred_check
          %p368 = pneg %p258
        $region50: #{tpu_custom_call.1} parent=11 // pred_check_branch
          %370 = sbr.rel (%p368) target = $region52
        $region51: #{tpu_custom_call.1} parent=11 // pred_region
          _
        $region52: #{tpu_custom_call.1} parent=11 // pred_fallthru
          _
        // Predicated region
        $region53: #{tpu_custom_call.1} parent=11 // pred_check
          %p371 = pneg %p279
        $region54: #{tpu_custom_call.1} parent=11 // pred_check_branch
          %373 = sbr.rel (%p371) target = $region56
        $region55: #{tpu_custom_call.1} parent=11 // pred_region
          _
        $region56: #{tpu_custom_call.1} parent=11 // pred_fallthru
          _
        // Predicated region
        $region57: #{tpu_custom_call.1} parent=11 // pred_check
          %p374 = pneg %p300
        $region58: #{tpu_custom_call.1} parent=11 // pred_check_branch
          %376 = sbr.rel (%p374) target = $region60
        $region59: #{tpu_custom_call.1} parent=11 // pred_region
          _
        $region60: #{tpu_custom_call.1} parent=11 // pred_fallthru
          _
      $region12: #{tpu_custom_call.1} parent=5 // pred_fallthru
        _
      %p377 = scmp.lt.s32.totalorder %s22, 2
      // Predicated region
      $region61: #{tpu_custom_call.1} parent=5 // pred_check
        %p378 = pneg %p377
      $region62: #{tpu_custom_call.1} parent=5 // pred_check_branch
        %380 = sbr.rel (%p378) target = $region64
      $region63: #{tpu_custom_call.1} parent=5 // pred_region
        // Predicated region
        $region65: #{tpu_custom_call.1} parent=63 // pred_check
          %p381 = pneg %p42
        $region66: #{tpu_custom_call.1} parent=63 // pred_check_branch
          %383 = sbr.rel (%p381) target = $region68
        $region67: #{tpu_custom_call.1} parent=63 // pred_region
          %p384 = scmp.lt.s32.totalorder %s22, 1
          %s385 = scalar_select %p384, %s22, 1
          %s386 = smul.addr %s385, 2
          %s387 = smul.addr %s386, 4
          %s388 = scalar_lea.vmem %s0, %s387
        $region68: #{tpu_custom_call.1} parent=63 // pred_fallthru
          _
      $region64: #{tpu_custom_call.1} parent=5 // pred_fallthru
        _
      %p389 = scmp.le.s32.totalorder 1, %s22
      %p390 = scmp.lt.s32.totalorder %s22, 3
      %p391 = pnand %p389, %p390
      %p392 = pneg %p391
      // Predicated region
      $region69: #{tpu_custom_call.1} parent=5 // pred_check
        _
      $region70: #{tpu_custom_call.1} parent=5 // pred_check_branch
        %394 = sbr.rel (%p391) target = $region72
      $region71: #{tpu_custom_call.1} parent=5 // pred_region
        %s395 = ssub.s32 %s22, 1
        %p396 = scmp.lt.s32.totalorder %s27, 1
        %s397 = scalar_select %p396, %s27, 1
        %s398 = smul.addr %s397, 2
        %s399 = smul.addr %s398, 4
        %s400 = scalar_lea.vmem %s0, %s399
        %p401 = pneg %p48
        %p402 = pneg %p45
        %p403 = pneg %p69
        %p404 = pneg %p66
        %p405 = pneg %p90
        %p406 = pneg %p87
        %p407 = pneg %p111
        %p408 = pneg %p108
        %p409 = pneg %p132
        %p410 = pneg %p129
        %p411 = pneg %p153
        %p412 = pneg %p150
        %p413 = pneg %p174
        %p414 = pneg %p171
        %p415 = pneg %p195
        %p416 = pneg %p192
        %p417 = pneg %p216
        %p418 = pneg %p213
        %p419 = pneg %p237
        %p420 = pneg %p234
        %p421 = pneg %p258
        %p422 = pneg %p255
        %p423 = pneg %p279
        %p424 = pneg %p276
        %p425 = pneg %p300
        %p426 = pneg %p297
        %p427 = pneg %p326
        %p428 = pneg %p323
        %s429 = sand.u32 %s313, 1
        %s430 = scalar_lea.sflag [#allocation4], %s429
        %s431 = sand.u32 %s313, 1
        %s432 = smul.addr %s431, 8
        %s433 = scalar_lea.vmem [#allocation3], %s432
        %p434 = scmp.lt.s32.totalorder %s27, 1
        %s435 = scalar_select %p434, %s27, 1
        %s436 = smul.addr %s435, 2
        %s437 = smul.addr %s436, 4
        %s438 = scalar_lea.vmem %s0, %s437
        %v439 = vld [vmem:[%s438] sm:$0xff]
        %v440 = vld [vmem:[%s3] sm:$0xff]
        %v441 = vld [vmem:[%s3 + $0x8] sm:$0xff]
        %v442 = vld [vmem:[%s3 + $0x10] sm:$0xff]
        %v443 = vld [vmem:[%s3 + $0x18] sm:$0xff]
        %v444 = vld [vmem:[%s3 + $0x20] sm:$0xff]
        %v445 = vld [vmem:[%s3 + $0x28] sm:$0xff]
        %v446 = vld [vmem:[%s3 + $0x30] sm:$0xff]
        %v447 = vld [vmem:[%s3 + $0x38] sm:$0xff]
        %v448 = vld [vmem:[%s3 + $0x40] sm:$0xff]
        %v449 = vld [vmem:[%s3 + $0x48] sm:$0xff]
        %v450 = vld [vmem:[%s3 + $0x50] sm:$0xff]
        %v451 = vld [vmem:[%s3 + $0x58] sm:$0xff]
        %v452 = vld [vmem:[%s3 + $0x60] sm:$0xff]
        %v453 = vld [vmem:[%s3 + $0x68] sm:$0xff]
        %v454 = vld [vmem:[%s3 + $0x70] sm:$0xff]
        %v455 = vld [vmem:[%s3 + $0x78] sm:$0xff]
        %v456 = vld [vmem:[%s3 + $0x80] sm:$0xff]
        %v457 = vld [vmem:[%s3 + $0x88] sm:$0xff]
        %v458 = vld [vmem:[%s3 + $0x90] sm:$0xff]
        %v459 = vld [vmem:[%s3 + $0x98] sm:$0xff]
        %v460 = vld [vmem:[%s3 + $0xa0] sm:$0xff]
        %v461 = vld [vmem:[%s3 + $0xa8] sm:$0xff]
        %v462 = vld [vmem:[%s3 + $0xb0] sm:$0xff]
        %v463 = vld [vmem:[%s3 + $0xb8] sm:$0xff]
        %v464 = vld [vmem:[%s3 + $0xc0] sm:$0xff]
        %v465 = vld [vmem:[%s3 + $0xc8] sm:$0xff]
        %v466 = vld [vmem:[%s3 + $0xd0] sm:$0xff]
        %v467 = vld [vmem:[%s3 + $0xd8] sm:$0xff]
        %v468 = vld [vmem:[%s3 + $0xe0] sm:$0xff]
        %v469 = vld [vmem:[%s3 + $0xe8] sm:$0xff]
        %v470 = vld [vmem:[%s3 + $0xf0] sm:$0xff]
        %v471 = vld [vmem:[%s3 + $0xf8] sm:$0xff]
        %473 = vst [vmem:[#allocation1] ss:$2 sm:$0xff] %v439
        %v474 = vld.sshfl [vmem:[#allocation1] sm:$0xff pattern:$0x75316420]
        %v475 = vld.sshfl [vmem:[#allocation1 + $0x8] sm:$0xff pattern:$0x75316420]
        %478 = vmatpush.msra.mxu0 %v455
        %479 = vmatpush.msra.mxu0 %v454
        %480 = vmatpush.msra.mxu0 %v453
        %481 = vmatpush.msra.mxu0 %v452
        %482 = vmatpush.msra.mxu0 %v451
        %483 = vmatpush.msra.mxu0 %v450
        %484 = vmatpush.msra.mxu0 %v449
        %485 = vmatpush.msra.mxu0 %v448
        %486 = vmatpush.msra.mxu0 %v447
        %487 = vmatpush.msra.mxu0 %v446
        %488 = vmatpush.msra.mxu0 %v445
        %489 = vmatpush.msra.mxu0 %v444
        %490 = vmatpush.msra.mxu0 %v443
        %491 = vmatpush.msra.mxu0 %v442
        %492 = vmatpush.msra.mxu0 %v441
        %493 = vmatpush.msra.mxu0 %v440
        %494 = vmatmul.f32.gmra.mxu0 %v474
        %v495 = vpop.f32.mrf.mxu0
        %v496 = vadd.f32 0.0, %v495
        %497 = vdwg.mxu0
        %498 = vmatpush.msra.mxu0 %v471
        %499 = vmatpush.msra.mxu0 %v470
        %500 = vmatpush.msra.mxu0 %v469
        %501 = vmatpush.msra.mxu0 %v468
        %502 = vmatpush.msra.mxu0 %v467
        %503 = vmatpush.msra.mxu0 %v466
        %504 = vmatpush.msra.mxu0 %v465
        %505 = vmatpush.msra.mxu0 %v464
        %506 = vmatpush.msra.mxu0 %v463
        %507 = vmatpush.msra.mxu0 %v462
        %508 = vmatpush.msra.mxu0 %v461
        %509 = vmatpush.msra.mxu0 %v460
        %510 = vmatpush.msra.mxu0 %v459
        %511 = vmatpush.msra.mxu0 %v458
        %512 = vmatpush.msra.mxu0 %v457
        %513 = vmatpush.msra.mxu0 %v456
        %514 = vmatmul.f32.gmra.mxu0 %v475
        %v515 = vpop.f32.mrf.mxu0
        %v516 = vadd.f32 %v496, %v515
        %517 = vdwg.mxu0
        %v518 = vld [vmem:[%s12] sm:$0xff]
        %v519 = vld [vmem:[%s4] sm:$0xf]
        %v520 = vld [vmem:[%s5] sm:$0xf]
        %521 = vst [vmem:[#allocation1] ss:$2 sm:$0xff] %v439
        %v522 = vld.sshfl [vmem:[#allocation1] sm:$0xff pattern:$0x75316420]
        %v523 = vld.sshfl [vmem:[#allocation1 + $0x8] sm:$0xff pattern:$0x75316420]
        %vm526 = vcmask 1043456
        %v527 = vsel %vm526, %v522, 0.0
        %v528 = vsel %vm526, %v523, 0.0
        %v529 = vadd.f32 %v527, %v528
        %530 = vadd.xlane.f32.xlu0 %v529
        %v531 = vpop.xlane.xlu0 %530
        %v532 = vrcp.pop 256.0
        %v533 = vmul.f32 256.0, %v532
        %v534 = vsub.f32 1.0, %v533
        %v535 = vmul.f32 %v532, %v534
        %v536 = vadd.f32 %v532, %v535
        %vm537 = vweird.f32 %v532
        %v538 = vsel %vm537, %v532, %v536
        %v539 = vmul.f32 %v531, %v538
        %v540 = vmul.f32 %v439, %v439
        %542 = vst [vmem:[#allocation1] ss:$2 sm:$0xff] %v540
        %v543 = vld.sshfl [vmem:[#allocation1] sm:$0xff pattern:$0x75316420]
        %v544 = vld.sshfl [vmem:[#allocation1 + $0x8] sm:$0xff pattern:$0x75316420]
        %v547 = vsel %vm526, %v543, 0.0
        %v548 = vsel %vm526, %v544, 0.0
        %v549 = vadd.f32 %v547, %v548
        %550 = vadd.xlane.f32.xlu0 %v549
        %v551 = vpop.xlane.xlu0 %550
        %v552 = vmul.f32 %v551, %v538
        %v553 = vmul.f32 %v539, %v539
        %v554 = vsub.f32 %v552, %v553
        %v557 = vunpack.c.l.s4 839922192
        %v558 = vunpack.c.0.s8 %v557
        %v559 = vperm.slane %v539, %v558
        %v561 = vsub.f32 %v439, %v559
        %v562 = vadd.f32 %v554, 1e-05
        %v563 = vrsqrt.pop %v562
        %v564 = vmul.f32 %v563, %v562
        %v565 = vmul.f32 %v564, %v563
        %v566 = vmul.f32 0.5, %v565
        %v567 = vsub.f32 1.5, %v566
        %v568 = vmul.f32 %v563, %v567
        %vm569 = vweird.f32 %v562
        %vm570 = vweird.f32 %v563
        %vm571 = vmor %vm569, %vm570
        %v572 = vsel %vm571, %v563, %v568
        %v573 = vmul.f32 %v572, %v519
        %575 = vset.pattern.permute.xlu0 0
        %576 = vperm.xlu0 %575, %v573
        %v577 = vpop.permute.xlu0 %576
        %v579 = vunpack.c.l.s4 839922192
        %v580 = vunpack.c.0.s8 %v579
        %v581 = vperm.slane %v577, %v580
        %v583 = vmul.f32 %v561, %v581
        %585 = vset.pattern.permute.xlu0 0
        %586 = vperm.xlu0 %585, %v520
        %v587 = vpop.permute.xlu0 %586
        %v589 = vunpack.c.l.s4 839922192
        %v590 = vunpack.c.0.s8 %v589
        %v591 = vperm.slane %v587, %v590
        %v593 = vadd.f32 %v583, %v591
        %vm594 = vcmp.gt.f32.partialorder %v593, 0.0
        %v595 = vmul.f32 %v593, 0.2
        %v596 = vsel %vm594, %v593, %v595
        %597 = vst [vmem:[#allocation2] sm:$0xff] 0.0
        %598 = vst [vmem:[#allocation2 + $0x8] sm:$0xff] 0.0
        %599 = vst [vmem:[#allocation2 + $0x4] sm:$0xff] %v596
        %v600 = vld [vmem:[#allocation2] sm:$0xff]
        %v601 = vld [vmem:[#allocation2 + $0x8] sm:$0xf]
        %v602 = vld [vmem:[%s1] ss:$8 sm:$0x3]
        %v604 = vperm.slane %v602, 0
        %v605 = vperm.slane %v602, 1
        %v606 = vrot.slane %v605, 4
        %v607 = vsel %vm526, %v604, %v606
        %608 = vrot.lane.b32.xlu0 %v607, 111
        %v609 = vpop.permute.xlu0 %608
        %v610 = vrot.slane %v609, 4
        %vm611 = vcmask 908288
        %v612 = vsel %vm611, %v610, %v609
        %v615 = vmul.f32 %v600, %v612
        %v616 = vmul.f32 %v601, %v610
        %v617 = vld [vmem:[%s8] sm:$0xf]
        %s618 = scalar_lea.vmem %s1, 1
        %v619 = vld [vmem:[%s618] ss:$8 sm:$0x3]
        %v621 = vperm.slane %v619, 0
        %v622 = vperm.slane %v619, 1
        %v623 = vrot.slane %v622, 4
        %v624 = vsel %vm526, %v621, %v623
        %625 = vrot.lane.b32.xlu0 %v624, 112
        %v626 = vpop.permute.xlu0 %625
        %v627 = vrot.slane %v626, 4
        %vm628 = vcmask 916480
        %v629 = vsel %vm628, %v627, %v626
        %v632 = vmul.f32 %v600, %v629
        %v633 = vmul.f32 %v601, %v627
        %s634 = scalar_lea.vmem %s8, 4
        %v635 = vld [vmem:[%s634] sm:$0xf]
        %638 = vst [vmem:[#allocation1] ss:$2 sm:$0xff] %v632
        %s639 = scalar_lea.vmem [#allocation1], 16
        %640 = vst [vmem:[%s639] ss:$2 sm:$0xff] %v633
        %v641 = vld.sshfl [vmem:[#allocation1] sm:$0xff pattern:$0x75316420]
        %v642 = vld.sshfl [vmem:[#allocation1 + $0x8] sm:$0xff pattern:$0x75316420]
        %v643 = vld.sshfl [vmem:[#allocation1 + $0x10] sm:$0xff pattern:$0x75316420]
        %644 = vrot.lane.b32.xlu0 %v641, 16
        %v645 = vpop.permute.xlu0 %644
        %646 = vrot.lane.b32.xlu0 %v642, 16
        %v647 = vpop.permute.xlu0 %646
        %648 = vrot.lane.b32.xlu0 %v643, 16
        %v649 = vpop.permute.xlu0 %648
        %vm650 = vcmask 130048
        %v651 = vsel %vm650, %v645, %v647
        %v652 = vsel %vm650, %v647, %v649
        %vm653 = vcmask 31744
        %v655 = vsel %vm653, %v635, 0
        %v657 = vsel %vm526, %v651, 0
        %v659 = vsel %vm526, %v652, 0
        %661 = vmatpush.msra.mxu0 0.0
        %662 = vmatpush.msra.mxu0 0.0
        %663 = vmatpush.msra.mxu0 0.0
        %664 = vmatpush.msra.mxu0 0.0
        %665 = vmatpush.msra.mxu0 0.0
        %666 = vmatpush.msra.mxu0 0.0
        %667 = vmatpush.msra.mxu0 0.0
        %668 = vmatpush.msra.mxu0 0.0
        %669 = vmatpush.msra.mxu0 0.0
        %670 = vmatpush.msra.mxu0 0.0
        %671 = vmatpush.msra.mxu0 0.0
        %672 = vmatpush.msra.mxu0 0.0
        %673 = vmatpush.msra.mxu0 0.0
        %674 = vmatpush.msra.mxu0 0.0
        %675 = vmatpush.msra.mxu0 0.0
        %676 = vmatpush.msra.mxu0 %v657
        %677 = vmatmul.f32.gmra.mxu0 %v655
        %v678 = vpop.f32.mrf.mxu0
        %v679 = vadd.f32 0.0, %v678
        %680 = vdwg.mxu0
        %681 = vmatpush.msra.mxu0 0.0
        %682 = vmatpush.msra.mxu0 0.0
        %683 = vmatpush.msra.mxu0 0.0
        %684 = vmatpush.msra.mxu0 0.0
        %685 = vmatpush.msra.mxu0 0.0
        %686 = vmatpush.msra.mxu0 0.0
        %687 = vmatpush.msra.mxu0 0.0
        %688 = vmatpush.msra.mxu0 0.0
        %689 = vmatpush.msra.mxu0 0.0
        %690 = vmatpush.msra.mxu0 0.0
        %691 = vmatpush.msra.mxu0 0.0
        %692 = vmatpush.msra.mxu0 0.0
        %693 = vmatpush.msra.mxu0 0.0
        %694 = vmatpush.msra.mxu0 0.0
        %695 = vmatpush.msra.mxu0 0.0
        %696 = vmatpush.msra.mxu0 %v659
        %697 = vmatmul.f32.gmra.mxu0 %v655
        %v698 = vpop.f32.mrf.mxu0
        %v699 = vadd.f32 0.0, %v698
        %700 = vdwg.mxu0
        %703 = vst [vmem:[#allocation1] ss:$2 sm:$0xff] %v615
        %s704 = scalar_lea.vmem [#allocation1], 16
        %705 = vst [vmem:[%s704] ss:$2 sm:$0xff] %v616
        %v706 = vld.sshfl [vmem:[#allocation1] sm:$0xff pattern:$0x75316420]
        %v707 = vld.sshfl [vmem:[#allocation1 + $0x8] sm:$0xff pattern:$0x75316420]
        %v708 = vld.sshfl [vmem:[#allocation1 + $0x10] sm:$0xff pattern:$0x75316420]
        %709 = vrot.lane.b32.xlu0 %v706, 17
        %v710 = vpop.permute.xlu0 %709
        %711 = vrot.lane.b32.xlu0 %v707, 17
        %v712 = vpop.permute.xlu0 %711
        %713 = vrot.lane.b32.xlu0 %v708, 17
        %v714 = vpop.permute.xlu0 %713
        %vm715 = vcmask 138240
        %v716 = vsel %vm715, %v710, %v712
        %v717 = vsel %vm715, %v712, %v714
        %v719 = vsel %vm653, %v617, 0
        %v721 = vsel %vm526, %v716, 0
        %v723 = vsel %vm526, %v717, 0
        %725 = vmatpush.msra.mxu0 0.0
        %726 = vmatpush.msra.mxu0 0.0
        %727 = vmatpush.msra.mxu0 0.0
        %728 = vmatpush.msra.mxu0 0.0
        %729 = vmatpush.msra.mxu0 0.0
        %730 = vmatpush.msra.mxu0 0.0
        %731 = vmatpush.msra.mxu0 0.0
        %732 = vmatpush.msra.mxu0 0.0
        %733 = vmatpush.msra.mxu0 0.0
        %734 = vmatpush.msra.mxu0 0.0
        %735 = vmatpush.msra.mxu0 0.0
        %736 = vmatpush.msra.mxu0 0.0
        %737 = vmatpush.msra.mxu0 0.0
        %738 = vmatpush.msra.mxu0 0.0
        %739 = vmatpush.msra.mxu0 0.0
        %740 = vmatpush.msra.mxu0 %v721
        %741 = vmatmul.f32.gmra.mxu0 %v719
        %v742 = vpop.f32.mrf.mxu0
        %v743 = vadd.f32 %v679, %v742
        %744 = vdwg.mxu0
        %745 = vmatpush.msra.mxu0 0.0
        %746 = vmatpush.msra.mxu0 0.0
        %747 = vmatpush.msra.mxu0 0.0
        %748 = vmatpush.msra.mxu0 0.0
        %749 = vmatpush.msra.mxu0 0.0
        %750 = vmatpush.msra.mxu0 0.0
        %751 = vmatpush.msra.mxu0 0.0
        %752 = vmatpush.msra.mxu0 0.0
        %753 = vmatpush.msra.mxu0 0.0
        %754 = vmatpush.msra.mxu0 0.0
        %755 = vmatpush.msra.mxu0 0.0
        %756 = vmatpush.msra.mxu0 0.0
        %757 = vmatpush.msra.mxu0 0.0
        %758 = vmatpush.msra.mxu0 0.0
        %759 = vmatpush.msra.mxu0 0.0
        %760 = vmatpush.msra.mxu0 %v723
        %761 = vmatmul.f32.gmra.mxu0 %v719
        %v762 = vpop.f32.mrf.mxu0
        %v763 = vadd.f32 %v699, %v762
        %764 = vdwg.mxu0
        %v765 = vld [vmem:[#allocation2] sm:$0xff]
        %v766 = vld [vmem:[#allocation2 + $0x8] sm:$0xf]
        %s767 = scalar_lea.vmem %s1, 2
        %v768 = vld [vmem:[%s767] ss:$8 sm:$0x3]
        %v770 = vperm.slane %v768, 0
        %v771 = vperm.slane %v768, 1
        %v772 = vrot.slane %v771, 4
        %v773 = vsel %vm526, %v770, %v772
        %774 = vrot.lane.b32.xlu0 %v773, 113
        %v775 = vpop.permute.xlu0 %774
        %v776 = vrot.slane %v775, 4
        %vm777 = vcmask 924672
        %v778 = vsel %vm777, %v776, %v775
        %v781 = vmul.f32 %v765, %v778
        %v782 = vmul.f32 %v766, %v776
        %s783 = scalar_lea.vmem %s8, 8
        %v784 = vld [vmem:[%s783] sm:$0xf]
        %787 = vst [vmem:[#allocation1] ss:$2 sm:$0xff] %v781
        %s788 = scalar_lea.vmem [#allocation1], 16
        %789 = vst [vmem:[%s788] ss:$2 sm:$0xff] %v782
        %v790 = vld.sshfl [vmem:[#allocation1] sm:$0xff pattern:$0x75316420]
        %v791 = vld.sshfl [vmem:[#allocation1 + $0x8] sm:$0xff pattern:$0x75316420]
        %v792 = vld.sshfl [vmem:[#allocation1 + $0x10] sm:$0xff pattern:$0x75316420]
        %793 = vrot.lane.b32.xlu0 %v790, 15
        %v794 = vpop.permute.xlu0 %793
        %795 = vrot.lane.b32.xlu0 %v791, 15
        %v796 = vpop.permute.xlu0 %795
        %797 = vrot.lane.b32.xlu0 %v792, 15
        %v798 = vpop.permute.xlu0 %797
        %vm799 = vcmask 121856
        %v800 = vsel %vm799, %v794, %v796
        %v801 = vsel %vm799, %v796, %v798
        %v803 = vsel %vm653, %v784, 0
        %v805 = vsel %vm526, %v800, 0
        %v807 = vsel %vm526, %v801, 0
        %809 = vmatpush.msra.mxu0 0.0
        %810 = vmatpush.msra.mxu0 0.0
        %811 = vmatpush.msra.mxu0 0.0
        %812 = vmatpush.msra.mxu0 0.0
        %813 = vmatpush.msra.mxu0 0.0
        %814 = vmatpush.msra.mxu0 0.0
        %815 = vmatpush.msra.mxu0 0.0
        %816 = vmatpush.msra.mxu0 0.0
        %817 = vmatpush.msra.mxu0 0.0
        %818 = vmatpush.msra.mxu0 0.0
        %819 = vmatpush.msra.mxu0 0.0
        %820 = vmatpush.msra.mxu0 0.0
        %821 = vmatpush.msra.mxu0 0.0
        %822 = vmatpush.msra.mxu0 0.0
        %823 = vmatpush.msra.mxu0 0.0
        %824 = vmatpush.msra.mxu0 %v805
        %825 = vmatmul.f32.gmra.mxu0 %v803
        %v826 = vpop.f32.mrf.mxu0
        %v827 = vadd.f32 0.0, %v826
        %828 = vdwg.mxu0
        %829 = vmatpush.msra.mxu0 0.0
        %830 = vmatpush.msra.mxu0 0.0
        %831 = vmatpush.msra.mxu0 0.0
        %832 = vmatpush.msra.mxu0 0.0
        %833 = vmatpush.msra.mxu0 0.0
        %834 = vmatpush.msra.mxu0 0.0
        %835 = vmatpush.msra.mxu0 0.0
        %836 = vmatpush.msra.mxu0 0.0
        %837 = vmatpush.msra.mxu0 0.0
        %838 = vmatpush.msra.mxu0 0.0
        %839 = vmatpush.msra.mxu0 0.0
        %840 = vmatpush.msra.mxu0 0.0
        %841 = vmatpush.msra.mxu0 0.0
        %842 = vmatpush.msra.mxu0 0.0
        %843 = vmatpush.msra.mxu0 0.0
        %844 = vmatpush.msra.mxu0 %v807
        %845 = vmatmul.f32.gmra.mxu0 %v803
        %v846 = vpop.f32.mrf.mxu0
        %v847 = vadd.f32 0.0, %v846
        %848 = vdwg.mxu0
        %v849 = vadd.f32 %v743, %v827
        %v850 = vadd.f32 %v763, %v847
        %v851 = vld [vmem:[#allocation2] sm:$0xff]
        %v852 = vld [vmem:[#allocation2 + $0x8] sm:$0xf]
        %s853 = scalar_lea.vmem %s1, 3
        %v854 = vld [vmem:[%s853] ss:$8 sm:$0x3]
        %v856 = vperm.slane %v854, 0
        %v857 = vperm.slane %v854, 1
        %v858 = vrot.slane %v857, 4
        %v859 = vsel %vm526, %v856, %v858
        %860 = vrot.lane.b32.xlu0 %v859, 127
        %v861 = vpop.permute.xlu0 %860
        %v862 = vrot.slane %v861, 4
        %vm863 = vcmask 1039360
        %v864 = vsel %vm863, %v862, %v861
        %v867 = vmul.f32 %v851, %v864
        %v868 = vmul.f32 %v852, %v862
        %s869 = scalar_lea.vmem %s8, 12
        %v870 = vld [vmem:[%s869] sm:$0xf]
        %873 = vst [vmem:[#allocation1] ss:$2 sm:$0xff] %v867
        %s874 = scalar_lea.vmem [#allocation1], 16
        %875 = vst [vmem:[%s874] ss:$2 sm:$0xff] %v868
        %v876 = vld.sshfl [vmem:[#allocation1] sm:$0xff pattern:$0x75316420]
        %v877 = vld.sshfl [vmem:[#allocation1 + $0x8] sm:$0xff pattern:$0x75316420]
        %v878 = vld.sshfl [vmem:[#allocation1 + $0x10] sm:$0xff pattern:$0x75316420]
        %879 = vrot.lane.b32.xlu0 %v876, 1
        %v880 = vpop.permute.xlu0 %879
        %881 = vrot.lane.b32.xlu0 %v877, 1
        %v882 = vpop.permute.xlu0 %881
        %883 = vrot.lane.b32.xlu0 %v878, 1
        %v884 = vpop.permute.xlu0 %883
        %vm885 = vcmask 7168
        %v886 = vsel %vm885, %v880, %v882
        %v887 = vsel %vm885, %v882, %v884
        %v889 = vsel %vm653, %v870, 0
        %v891 = vsel %vm526, %v886, 0
        %v893 = vsel %vm526, %v887, 0
        %895 = vmatpush.msra.mxu0 0.0
        %896 = vmatpush.msra.mxu0 0.0
        %897 = vmatpush.msra.mxu0 0.0
        %898 = vmatpush.msra.mxu0 0.0
        %899 = vmatpush.msra.mxu0 0.0
        %900 = vmatpush.msra.mxu0 0.0
        %901 = vmatpush.msra.mxu0 0.0
        %902 = vmatpush.msra.mxu0 0.0
        %903 = vmatpush.msra.mxu0 0.0
        %904 = vmatpush.msra.mxu0 0.0
        %905 = vmatpush.msra.mxu0 0.0
        %906 = vmatpush.msra.mxu0 0.0
        %907 = vmatpush.msra.mxu0 0.0
        %908 = vmatpush.msra.mxu0 0.0
        %909 = vmatpush.msra.mxu0 0.0
        %910 = vmatpush.msra.mxu0 %v891
        %911 = vmatmul.f32.gmra.mxu0 %v889
        %v912 = vpop.f32.mrf.mxu0
        %v913 = vadd.f32 0.0, %v912
        %914 = vdwg.mxu0
        %915 = vmatpush.msra.mxu0 0.0
        %916 = vmatpush.msra.mxu0 0.0
        %917 = vmatpush.msra.mxu0 0.0
        %918 = vmatpush.msra.mxu0 0.0
        %919 = vmatpush.msra.mxu0 0.0
        %920 = vmatpush.msra.mxu0 0.0
        %921 = vmatpush.msra.mxu0 0.0
        %922 = vmatpush.msra.mxu0 0.0
        %923 = vmatpush.msra.mxu0 0.0
        %924 = vmatpush.msra.mxu0 0.0
        %925 = vmatpush.msra.mxu0 0.0
        %926 = vmatpush.msra.mxu0 0.0
        %927 = vmatpush.msra.mxu0 0.0
        %928 = vmatpush.msra.mxu0 0.0
        %929 = vmatpush.msra.mxu0 0.0
        %930 = vmatpush.msra.mxu0 %v893
        %931 = vmatmul.f32.gmra.mxu0 %v889
        %v932 = vpop.f32.mrf.mxu0
        %v933 = vadd.f32 0.0, %v932
        %934 = vdwg.mxu0
        %v935 = vadd.f32 %v849, %v913
        %v936 = vadd.f32 %v850, %v933
        %v937 = vld [vmem:[#allocation2 + $0x4] sm:$0xff]
        %s938 = scalar_lea.vmem %s1, 4
        %v939 = vld [vmem:[%s938] ss:$8 sm:$0x3]
        %v941 = vperm.slane %v939, 0
        %v942 = vperm.slane %v939, 1
        %v943 = vrot.slane %v942, 4
        %v944 = vsel %vm526, %v941, %v943
        %v946 = vmul.f32 %v937, %v944
        %s947 = scalar_lea.vmem %s8, 16
        %v948 = vld [vmem:[%s947] sm:$0xf]
        %950 = vst [vmem:[#allocation1] ss:$2 sm:$0xff] %v946
        %v951 = vld.sshfl [vmem:[#allocation1] sm:$0xff pattern:$0x75316420]
        %v952 = vld.sshfl [vmem:[#allocation1 + $0x8] sm:$0xff pattern:$0x75316420]
        %v954 = vsel %vm653, %v948, 0
        %v956 = vsel %vm526, %v951, 0
        %v958 = vsel %vm526, %v952, 0
        %960 = vmatpush.msra.mxu0 0.0
        %961 = vmatpush.msra.mxu0 0.0
        %962 = vmatpush.msra.mxu0 0.0
        %963 = vmatpush.msra.mxu0 0.0
        %964 = vmatpush.msra.mxu0 0.0
        %965 = vmatpush.msra.mxu0 0.0
        %966 = vmatpush.msra.mxu0 0.0
        %967 = vmatpush.msra.mxu0 0.0
        %968 = vmatpush.msra.mxu0 0.0
        %969 = vmatpush.msra.mxu0 0.0
        %970 = vmatpush.msra.mxu0 0.0
        %971 = vmatpush.msra.mxu0 0.0
        %972 = vmatpush.msra.mxu0 0.0
        %973 = vmatpush.msra.mxu0 0.0
        %974 = vmatpush.msra.mxu0 0.0
        %975 = vmatpush.msra.mxu0 %v956
        %976 = vmatmul.f32.gmra.mxu0 %v954
        %v977 = vpop.f32.mrf.mxu0
        %v978 = vadd.f32 0.0, %v977
        %979 = vdwg.mxu0
        %980 = vmatpush.msra.mxu0 0.0
        %981 = vmatpush.msra.mxu0 0.0
        %982 = vmatpush.msra.mxu0 0.0
        %983 = vmatpush.msra.mxu0 0.0
        %984 = vmatpush.msra.mxu0 0.0
        %985 = vmatpush.msra.mxu0 0.0
        %986 = vmatpush.msra.mxu0 0.0
        %987 = vmatpush.msra.mxu0 0.0
        %988 = vmatpush.msra.mxu0 0.0
        %989 = vmatpush.msra.mxu0 0.0
        %990 = vmatpush.msra.mxu0 0.0
        %991 = vmatpush.msra.mxu0 0.0
        %992 = vmatpush.msra.mxu0 0.0
        %993 = vmatpush.msra.mxu0 0.0
        %994 = vmatpush.msra.mxu0 0.0
        %995 = vmatpush.msra.mxu0 %v958
        %996 = vmatmul.f32.gmra.mxu0 %v954
        %v997 = vpop.f32.mrf.mxu0
        %v998 = vadd.f32 0.0, %v997
        %999 = vdwg.mxu0
        %v1000 = vadd.f32 %v935, %v978
        %v1001 = vadd.f32 %v936, %v998
        %v1002 = vld [vmem:[#allocation2 + $0x4] sm:$0xff]
        %v1003 = vld [vmem:[#allocation2 + $0xc] sm:$0xf]
        %s1004 = scalar_lea.vmem %s1, 5
        %v1005 = vld [vmem:[%s1004] ss:$8 sm:$0x3]
        %v1007 = vperm.slane %v1005, 0
        %v1008 = vperm.slane %v1005, 1
        %v1009 = vrot.slane %v1008, 4
        %v1010 = vsel %vm526, %v1007, %v1009
        %1011 = vrot.lane.b32.xlu0 %v1010, 1
        %v1012 = vpop.permute.xlu0 %1011
        %v1013 = vrot.slane %v1012, 4
        %v1014 = vsel %vm885, %v1013, %v1012
        %v1017 = vmul.f32 %v1002, %v1014
        %v1018 = vmul.f32 %v1003, %v1013
        %s1019 = scalar_lea.vmem %s8, 20
        %v1020 = vld [vmem:[%s1019] sm:$0xf]
        %1023 = vst [vmem:[#allocation1] ss:$2 sm:$0xff] %v1017
        %s1024 = scalar_lea.vmem [#allocation1], 16
        %1025 = vst [vmem:[%s1024] ss:$2 sm:$0xff] %v1018
        %v1026 = vld.sshfl [vmem:[#allocation1] sm:$0xff pattern:$0x75316420]
        %v1027 = vld.sshfl [vmem:[#allocation1 + $0x8] sm:$0xff pattern:$0x75316420]
        %v1028 = vld.sshfl [vmem:[#allocation1 + $0x10] sm:$0xff pattern:$0x75316420]
        %1029 = vrot.lane.b32.xlu0 %v1026, 127
        %v1030 = vpop.permute.xlu0 %1029
        %1031 = vrot.lane.b32.xlu0 %v1027, 127
        %v1032 = vpop.permute.xlu0 %1031
        %1033 = vrot.lane.b32.xlu0 %v1028, 127
        %v1034 = vpop.permute.xlu0 %1033
        %v1035 = vsel %vm863, %v1030, %v1032
        %v1036 = vsel %vm863, %v1032, %v1034
        %v1038 = vsel %vm653, %v1020, 0
        %v1040 = vsel %vm526, %v1035, 0
        %v1042 = vsel %vm526, %v1036, 0
        %1044 = vmatpush.msra.mxu0 0.0
        %1045 = vmatpush.msra.mxu0 0.0
        %1046 = vmatpush.msra.mxu0 0.0
        %1047 = vmatpush.msra.mxu0 0.0
        %1048 = vmatpush.msra.mxu0 0.0
        %1049 = vmatpush.msra.mxu0 0.0
        %1050 = vmatpush.msra.mxu0 0.0
        %1051 = vmatpush.msra.mxu0 0.0
        %1052 = vmatpush.msra.mxu0 0.0
        %1053 = vmatpush.msra.mxu0 0.0
        %1054 = vmatpush.msra.mxu0 0.0
        %1055 = vmatpush.msra.mxu0 0.0
        %1056 = vmatpush.msra.mxu0 0.0
        %1057 = vmatpush.msra.mxu0 0.0
        %1058 = vmatpush.msra.mxu0 0.0
        %1059 = vmatpush.msra.mxu0 %v1040
        %1060 = vmatmul.f32.gmra.mxu0 %v1038
        %v1061 = vpop.f32.mrf.mxu0
        %v1062 = vadd.f32 0.0, %v1061
        %1063 = vdwg.mxu0
        %1064 = vmatpush.msra.mxu0 0.0
        %1065 = vmatpush.msra.mxu0 0.0
        %1066 = vmatpush.msra.mxu0 0.0
        %1067 = vmatpush.msra.mxu0 0.0
        %1068 = vmatpush.msra.mxu0 0.0
        %1069 = vmatpush.msra.mxu0 0.0
        %1070 = vmatpush.msra.mxu0 0.0
        %1071 = vmatpush.msra.mxu0 0.0
        %1072 = vmatpush.msra.mxu0 0.0
        %1073 = vmatpush.msra.mxu0 0.0
        %1074 = vmatpush.msra.mxu0 0.0
        %1075 = vmatpush.msra.mxu0 0.0
        %1076 = vmatpush.msra.mxu0 0.0
        %1077 = vmatpush.msra.mxu0 0.0
        %1078 = vmatpush.msra.mxu0 0.0
        %1079 = vmatpush.msra.mxu0 %v1042
        %1080 = vmatmul.f32.gmra.mxu0 %v1038
        %v1081 = vpop.f32.mrf.mxu0
        %v1082 = vadd.f32 0.0, %v1081
        %1083 = vdwg.mxu0
        %v1084 = vadd.f32 %v1000, %v1062
        %v1085 = vadd.f32 %v1001, %v1082
        %v1086 = vld [vmem:[#allocation2 + $0x4] sm:$0xff]
        %v1087 = vld [vmem:[#allocation2 + $0xc] sm:$0xf]
        %s1088 = scalar_lea.vmem %s1, 6
        %v1089 = vld [vmem:[%s1088] ss:$8 sm:$0x3]
        %v1091 = vperm.slane %v1089, 0
        %v1092 = vperm.slane %v1089, 1
        %v1093 = vrot.slane %v1092, 4
        %v1094 = vsel %vm526, %v1091, %v1093
        %1095 = vrot.lane.b32.xlu0 %v1094, 15
        %v1096 = vpop.permute.xlu0 %1095
        %v1097 = vrot.slane %v1096, 4
        %v1098 = vsel %vm799, %v1097, %v1096
        %v1101 = vmul.f32 %v1086, %v1098
        %v1102 = vmul.f32 %v1087, %v1097
        %s1103 = scalar_lea.vmem %s8, 24
        %v1104 = vld [vmem:[%s1103] sm:$0xf]
        %1107 = vst [vmem:[#allocation1] ss:$2 sm:$0xff] %v1101
        %s1108 = scalar_lea.vmem [#allocation1], 16
        %1109 = vst [vmem:[%s1108] ss:$2 sm:$0xff] %v1102
        %v1110 = vld.sshfl [vmem:[#allocation1] sm:$0xff pattern:$0x75316420]
        %v1111 = vld.sshfl [vmem:[#allocation1 + $0x8] sm:$0xff pattern:$0x75316420]
        %v1112 = vld.sshfl [vmem:[#allocation1 + $0x10] sm:$0xff pattern:$0x75316420]
        %1113 = vrot.lane.b32.xlu0 %v1110, 113
        %v1114 = vpop.permute.xlu0 %1113
        %1115 = vrot.lane.b32.xlu0 %v1111, 113
        %v1116 = vpop.permute.xlu0 %1115
        %1117 = vrot.lane.b32.xlu0 %v1112, 113
        %v1118 = vpop.permute.xlu0 %1117
        %v1119 = vsel %vm777, %v1114, %v1116
        %v1120 = vsel %vm777, %v1116, %v1118
        %v1122 = vsel %vm653, %v1104, 0
        %v1124 = vsel %vm526, %v1119, 0
        %v1126 = vsel %vm526, %v1120, 0
        %1128 = vmatpush.msra.mxu0 0.0
        %1129 = vmatpush.msra.mxu0 0.0
        %1130 = vmatpush.msra.mxu0 0.0
        %1131 = vmatpush.msra.mxu0 0.0
        %1132 = vmatpush.msra.mxu0 0.0
        %1133 = vmatpush.msra.mxu0 0.0
        %1134 = vmatpush.msra.mxu0 0.0
        %1135 = vmatpush.msra.mxu0 0.0
        %1136 = vmatpush.msra.mxu0 0.0
        %1137 = vmatpush.msra.mxu0 0.0
        %1138 = vmatpush.msra.mxu0 0.0
        %1139 = vmatpush.msra.mxu0 0.0
        %1140 = vmatpush.msra.mxu0 0.0
        %1141 = vmatpush.msra.mxu0 0.0
        %1142 = vmatpush.msra.mxu0 0.0
        %1143 = vmatpush.msra.mxu0 %v1124
        %1144 = vmatmul.f32.gmra.mxu0 %v1122
        %v1145 = vpop.f32.mrf.mxu0
        %v1146 = vadd.f32 0.0, %v1145
        %1147 = vdwg.mxu0
        %1148 = vmatpush.msra.mxu0 0.0
        %1149 = vmatpush.msra.mxu0 0.0
        %1150 = vmatpush.msra.mxu0 0.0
        %1151 = vmatpush.msra.mxu0 0.0
        %1152 = vmatpush.msra.mxu0 0.0
        %1153 = vmatpush.msra.mxu0 0.0
        %1154 = vmatpush.msra.mxu0 0.0
        %1155 = vmatpush.msra.mxu0 0.0
        %1156 = vmatpush.msra.mxu0 0.0
        %1157 = vmatpush.msra.mxu0 0.0
        %1158 = vmatpush.msra.mxu0 0.0
        %1159 = vmatpush.msra.mxu0 0.0
        %1160 = vmatpush.msra.mxu0 0.0
        %1161 = vmatpush.msra.mxu0 0.0
        %1162 = vmatpush.msra.mxu0 0.0
        %1163 = vmatpush.msra.mxu0 %v1126
        %1164 = vmatmul.f32.gmra.mxu0 %v1122
        %v1165 = vpop.f32.mrf.mxu0
        %v1166 = vadd.f32 0.0, %v1165
        %1167 = vdwg.mxu0
        %v1168 = vadd.f32 %v1084, %v1146
        %v1169 = vadd.f32 %v1085, %v1166
        %v1170 = vld [vmem:[#allocation2 + $0x4] sm:$0xff]
        %v1171 = vld [vmem:[#allocation2 + $0xc] sm:$0xf]
        %s1172 = scalar_lea.vmem %s1, 7
        %v1173 = vld [vmem:[%s1172] ss:$8 sm:$0x3]
        %v1175 = vperm.slane %v1173, 0
        %v1176 = vperm.slane %v1173, 1
        %v1177 = vrot.slane %v1176, 4
        %v1178 = vsel %vm526, %v1175, %v1177
        %1179 = vrot.lane.b32.xlu0 %v1178, 16
        %v1180 = vpop.permute.xlu0 %1179
        %v1181 = vrot.slane %v1180, 4
        %v1182 = vsel %vm650, %v1181, %v1180
        %v1185 = vmul.f32 %v1170, %v1182
        %v1186 = vmul.f32 %v1171, %v1181
        %s1187 = scalar_lea.vmem %s8, 28
        %v1188 = vld [vmem:[%s1187] sm:$0xf]
        %1191 = vst [vmem:[#allocation1] ss:$2 sm:$0xff] %v1185
        %s1192 = scalar_lea.vmem [#allocation1], 16
        %1193 = vst [vmem:[%s1192] ss:$2 sm:$0xff] %v1186
        %v1194 = vld.sshfl [vmem:[#allocation1] sm:$0xff pattern:$0x75316420]
        %v1195 = vld.sshfl [vmem:[#allocation1 + $0x8] sm:$0xff pattern:$0x75316420]
        %v1196 = vld.sshfl [vmem:[#allocation1 + $0x10] sm:$0xff pattern:$0x75316420]
        %1197 = vrot.lane.b32.xlu0 %v1194, 112
        %v1198 = vpop.permute.xlu0 %1197
        %1199 = vrot.lane.b32.xlu0 %v1195, 112
        %v1200 = vpop.permute.xlu0 %1199
        %1201 = vrot.lane.b32.xlu0 %v1196, 112
        %v1202 = vpop.permute.xlu0 %1201
        %v1203 = vsel %vm628, %v1198, %v1200
        %v1204 = vsel %vm628, %v1200, %v1202
        %v1206 = vsel %vm653, %v1188, 0
        %v1208 = vsel %vm526, %v1203, 0
        %v1210 = vsel %vm526, %v1204, 0
        %1212 = vmatpush.msra.mxu0 0.0
        %1213 = vmatpush.msra.mxu0 0.0
        %1214 = vmatpush.msra.mxu0 0.0
        %1215 = vmatpush.msra.mxu0 0.0
        %1216 = vmatpush.msra.mxu0 0.0
        %1217 = vmatpush.msra.mxu0 0.0
        %1218 = vmatpush.msra.mxu0 0.0
        %1219 = vmatpush.msra.mxu0 0.0
        %1220 = vmatpush.msra.mxu0 0.0
        %1221 = vmatpush.msra.mxu0 0.0
        %1222 = vmatpush.msra.mxu0 0.0
        %1223 = vmatpush.msra.mxu0 0.0
        %1224 = vmatpush.msra.mxu0 0.0
        %1225 = vmatpush.msra.mxu0 0.0
        %1226 = vmatpush.msra.mxu0 0.0
        %1227 = vmatpush.msra.mxu0 %v1208
        %1228 = vmatmul.f32.gmra.mxu0 %v1206
        %v1229 = vpop.f32.mrf.mxu0
        %v1230 = vadd.f32 0.0, %v1229
        %1231 = vdwg.mxu0
        %1232 = vmatpush.msra.mxu0 0.0
        %1233 = vmatpush.msra.mxu0 0.0
        %1234 = vmatpush.msra.mxu0 0.0
        %1235 = vmatpush.msra.mxu0 0.0
        %1236 = vmatpush.msra.mxu0 0.0
        %1237 = vmatpush.msra.mxu0 0.0
        %1238 = vmatpush.msra.mxu0 0.0
        %1239 = vmatpush.msra.mxu0 0.0
        %1240 = vmatpush.msra.mxu0 0.0
        %1241 = vmatpush.msra.mxu0 0.0
        %1242 = vmatpush.msra.mxu0 0.0
        %1243 = vmatpush.msra.mxu0 0.0
        %1244 = vmatpush.msra.mxu0 0.0
        %1245 = vmatpush.msra.mxu0 0.0
        %1246 = vmatpush.msra.mxu0 0.0
        %1247 = vmatpush.msra.mxu0 %v1210
        %1248 = vmatmul.f32.gmra.mxu0 %v1206
        %v1249 = vpop.f32.mrf.mxu0
        %v1250 = vadd.f32 0.0, %v1249
        %1251 = vdwg.mxu0
        %v1252 = vadd.f32 %v1168, %v1230
        %v1253 = vadd.f32 %v1169, %v1250
        %v1254 = vld [vmem:[#allocation2 + $0x4] sm:$0xff]
        %v1255 = vld [vmem:[#allocation2 + $0xc] sm:$0xf]
        %s1256 = scalar_lea.vmem %s1, 16
        %v1257 = vld [vmem:[%s1256] ss:$8 sm:$0x3]
        %v1259 = vperm.slane %v1257, 0
        %v1260 = vperm.slane %v1257, 1
        %v1261 = vrot.slane %v1260, 4
        %v1262 = vsel %vm526, %v1259, %v1261
        %1263 = vrot.lane.b32.xlu0 %v1262, 17
        %v1264 = vpop.permute.xlu0 %1263
        %v1265 = vrot.slane %v1264, 4
        %v1266 = vsel %vm715, %v1265, %v1264
        %v1269 = vmul.f32 %v1254, %v1266
        %v1270 = vmul.f32 %v1255, %v1265
        %s1271 = scalar_lea.vmem %s8, 32
        %v1272 = vld [vmem:[%s1271] sm:$0xf]
        %1275 = vst [vmem:[#allocation1] ss:$2 sm:$0xff] %v1269
        %s1276 = scalar_lea.vmem [#allocation1], 16
        %1277 = vst [vmem:[%s1276] ss:$2 sm:$0xff] %v1270
        %v1278 = vld.sshfl [vmem:[#allocation1] sm:$0xff pattern:$0x75316420]
        %v1279 = vld.sshfl [vmem:[#allocation1 + $0x8] sm:$0xff pattern:$0x75316420]
        %v1280 = vld.sshfl [vmem:[#allocation1 + $0x10] sm:$0xff pattern:$0x75316420]
        %1281 = vrot.lane.b32.xlu0 %v1278, 111
        %v1282 = vpop.permute.xlu0 %1281
        %1283 = vrot.lane.b32.xlu0 %v1279, 111
        %v1284 = vpop.permute.xlu0 %1283
        %1285 = vrot.lane.b32.xlu0 %v1280, 111
        %v1286 = vpop.permute.xlu0 %1285
        %v1287 = vsel %vm611, %v1282, %v1284
        %v1288 = vsel %vm611, %v1284, %v1286
        %v1290 = vsel %vm653, %v1272, 0
        %v1292 = vsel %vm526, %v1287, 0
        %v1294 = vsel %vm526, %v1288, 0
        %1296 = vmatpush.msra.mxu0 0.0
        %1297 = vmatpush.msra.mxu0 0.0
        %1298 = vmatpush.msra.mxu0 0.0
        %1299 = vmatpush.msra.mxu0 0.0
        %1300 = vmatpush.msra.mxu0 0.0
        %1301 = vmatpush.msra.mxu0 0.0
        %1302 = vmatpush.msra.mxu0 0.0
        %1303 = vmatpush.msra.mxu0 0.0
        %1304 = vmatpush.msra.mxu0 0.0
        %1305 = vmatpush.msra.mxu0 0.0
        %1306 = vmatpush.msra.mxu0 0.0
        %1307 = vmatpush.msra.mxu0 0.0
        %1308 = vmatpush.msra.mxu0 0.0
        %1309 = vmatpush.msra.mxu0 0.0
        %1310 = vmatpush.msra.mxu0 0.0
        %1311 = vmatpush.msra.mxu0 %v1292
        %1312 = vmatmul.f32.gmra.mxu0 %v1290
        %v1313 = vpop.f32.mrf.mxu0
        %v1314 = vadd.f32 0.0, %v1313
        %1315 = vdwg.mxu0
        %1316 = vmatpush.msra.mxu0 0.0
        %1317 = vmatpush.msra.mxu0 0.0
        %1318 = vmatpush.msra.mxu0 0.0
        %1319 = vmatpush.msra.mxu0 0.0
        %1320 = vmatpush.msra.mxu0 0.0
        %1321 = vmatpush.msra.mxu0 0.0
        %1322 = vmatpush.msra.mxu0 0.0
        %1323 = vmatpush.msra.mxu0 0.0
        %1324 = vmatpush.msra.mxu0 0.0
        %1325 = vmatpush.msra.mxu0 0.0
        %1326 = vmatpush.msra.mxu0 0.0
        %1327 = vmatpush.msra.mxu0 0.0
        %1328 = vmatpush.msra.mxu0 0.0
        %1329 = vmatpush.msra.mxu0 0.0
        %1330 = vmatpush.msra.mxu0 0.0
        %1331 = vmatpush.msra.mxu0 %v1294
        %1332 = vmatmul.f32.gmra.mxu0 %v1290
        %v1333 = vpop.f32.mrf.mxu0
        %v1334 = vadd.f32 0.0, %v1333
        %1335 = vdwg.mxu0
        %v1336 = vadd.f32 %v1252, %v1314
        %v1337 = vadd.f32 %v1253, %v1334
        %v1338 = vld [vmem:[%s9] sm:$0xf]
        %1340 = vset.pattern.permute.xlu0 0
        %1341 = vperm.xlu0 %1340, %v1338
        %v1342 = vpop.permute.xlu0 %1341
        %v1344 = vadd.f32 %v1336, %v1342
        %v1345 = vadd.f32 %v1337, %v1342
        %v1346 = vld [vmem:[%s3] sm:$0xff]
        %v1347 = vld [vmem:[%s3 + $0x8] sm:$0xff]
        %v1348 = vld [vmem:[%s3 + $0x10] sm:$0xff]
        %v1349 = vld [vmem:[%s3 + $0x18] sm:$0xff]
        %v1350 = vld [vmem:[%s3 + $0x20] sm:$0xff]
        %v1351 = vld [vmem:[%s3 + $0x28] sm:$0xff]
        %v1352 = vld [vmem:[%s3 + $0x30] sm:$0xff]
        %v1353 = vld [vmem:[%s3 + $0x38] sm:$0xff]
        %v1354 = vld [vmem:[%s3 + $0x40] sm:$0xff]
        %v1355 = vld [vmem:[%s3 + $0x48] sm:$0xff]
        %v1356 = vld [vmem:[%s3 + $0x50] sm:$0xff]
        %v1357 = vld [vmem:[%s3 + $0x58] sm:$0xff]
        %v1358 = vld [vmem:[%s3 + $0x60] sm:$0xff]
        %v1359 = vld [vmem:[%s3 + $0x68] sm:$0xff]
        %v1360 = vld [vmem:[%s3 + $0x70] sm:$0xff]
        %v1361 = vld [vmem:[%s3 + $0x78] sm:$0xff]
        %v1362 = vld [vmem:[%s3 + $0x80] sm:$0xff]
        %v1363 = vld [vmem:[%s3 + $0x88] sm:$0xff]
        %v1364 = vld [vmem:[%s3 + $0x90] sm:$0xff]
        %v1365 = vld [vmem:[%s3 + $0x98] sm:$0xff]
        %v1366 = vld [vmem:[%s3 + $0xa0] sm:$0xff]
        %v1367 = vld [vmem:[%s3 + $0xa8] sm:$0xff]
        %v1368 = vld [vmem:[%s3 + $0xb0] sm:$0xff]
        %v1369 = vld [vmem:[%s3 + $0xb8] sm:$0xff]
        %v1370 = vld [vmem:[%s3 + $0xc0] sm:$0xff]
        %v1371 = vld [vmem:[%s3 + $0xc8] sm:$0xff]
        %v1372 = vld [vmem:[%s3 + $0xd0] sm:$0xff]
        %v1373 = vld [vmem:[%s3 + $0xd8] sm:$0xff]
        %v1374 = vld [vmem:[%s3 + $0xe0] sm:$0xff]
        %v1375 = vld [vmem:[%s3 + $0xe8] sm:$0xff]
        %v1376 = vld [vmem:[%s3 + $0xf0] sm:$0xff]
        %v1377 = vld [vmem:[%s3 + $0xf8] sm:$0xff]
        %1378 = vmatpush.msra.mxu0 %v1361
        %1379 = vmatpush.msra.mxu0 %v1360
        %1380 = vmatpush.msra.mxu0 %v1359
        %1381 = vmatpush.msra.mxu0 %v1358
        %1382 = vmatpush.msra.mxu0 %v1357
        %1383 = vmatpush.msra.mxu0 %v1356
        %1384 = vmatpush.msra.mxu0 %v1355
        %1385 = vmatpush.msra.mxu0 %v1354
        %1386 = vmatpush.msra.mxu0 %v1353
        %1387 = vmatpush.msra.mxu0 %v1352
        %1388 = vmatpush.msra.mxu0 %v1351
        %1389 = vmatpush.msra.mxu0 %v1350
        %1390 = vmatpush.msra.mxu0 %v1349
        %1391 = vmatpush.msra.mxu0 %v1348
        %1392 = vmatpush.msra.mxu0 %v1347
        %1393 = vmatpush.msra.mxu0 %v1346
        %1394 = vmatmul.f32.gmra.mxu0 %v1344
        %v1395 = vpop.f32.mrf.mxu0
        %v1396 = vadd.f32 0.0, %v1395
        %1397 = vdwg.mxu0
        %1398 = vmatpush.msra.mxu0 %v1377
        %1399 = vmatpush.msra.mxu0 %v1376
        %1400 = vmatpush.msra.mxu0 %v1375
        %1401 = vmatpush.msra.mxu0 %v1374
        %1402 = vmatpush.msra.mxu0 %v1373
        %1403 = vmatpush.msra.mxu0 %v1372
        %1404 = vmatpush.msra.mxu0 %v1371
        %1405 = vmatpush.msra.mxu0 %v1370
        %1406 = vmatpush.msra.mxu0 %v1369
        %1407 = vmatpush.msra.mxu0 %v1368
        %1408 = vmatpush.msra.mxu0 %v1367
        %1409 = vmatpush.msra.mxu0 %v1366
        %1410 = vmatpush.msra.mxu0 %v1365
        %1411 = vmatpush.msra.mxu0 %v1364
        %1412 = vmatpush.msra.mxu0 %v1363
        %1413 = vmatpush.msra.mxu0 %v1362
        %1414 = vmatmul.f32.gmra.mxu0 %v1345
        %v1415 = vpop.f32.mrf.mxu0
        %v1416 = vadd.f32 %v1396, %v1415
        %1417 = vdwg.mxu0
        %v1418 = vld [vmem:[%s6] sm:$0xf]
        %v1419 = vld [vmem:[%s7] sm:$0xf]
        %vm1420 = vcmask 519168
        %v1421 = vsel %vm1420, %v1416, 0.0
        %1422 = vadd.xlane.f32.xlu0 %v1421
        %v1423 = vpop.xlane.xlu0 %1422
        %v1424 = vrcp.pop 64.0
        %v1425 = vmul.f32 64.0, %v1424
        %v1426 = vsub.f32 1.0, %v1425
        %v1427 = vmul.f32 %v1424, %v1426
        %v1428 = vadd.f32 %v1424, %v1427
        %vm1429 = vweird.f32 %v1424
        %v1430 = vsel %vm1429, %v1424, %v1428
        %v1431 = vmul.f32 %v1423, %v1430
        %v1432 = vmul.f32 %v1416, %v1416
        %v1433 = vsel %vm1420, %v1432, 0.0
        %1434 = vadd.xlane.f32.xlu0 %v1433
        %v1435 = vpop.xlane.xlu0 %1434
        %v1436 = vmul.f32 %v1435, %v1430
        %v1437 = vmul.f32 %v1431, %v1431
        %v1438 = vsub.f32 %v1436, %v1437
        %v1439 = vsub.f32 %v1416, %v1431
        %v1440 = vadd.f32 %v1438, 1e-05
        %v1441 = vrsqrt.pop %v1440
        %v1442 = vmul.f32 %v1441, %v1440
        %v1443 = vmul.f32 %v1442, %v1441
        %v1444 = vmul.f32 0.5, %v1443
        %v1445 = vsub.f32 1.5, %v1444
        %v1446 = vmul.f32 %v1441, %v1445
        %vm1447 = vweird.f32 %v1440
        %vm1448 = vweird.f32 %v1441
        %vm1449 = vmor %vm1447, %vm1448
        %v1450 = vsel %vm1449, %v1441, %v1446
        %v1451 = vmul.f32 %v1450, %v1418
        %1453 = vset.pattern.permute.xlu0 0
        %1454 = vperm.xlu0 %1453, %v1451
        %v1455 = vpop.permute.xlu0 %1454
        %v1457 = vmul.f32 %v1439, %v1455
        %1459 = vset.pattern.permute.xlu0 0
        %1460 = vperm.xlu0 %1459, %v1419
        %v1461 = vpop.permute.xlu0 %1460
        %v1463 = vadd.f32 %v1457, %v1461
        %vm1464 = vcmp.gt.f32.partialorder %v1463, 0.0
        %v1465 = vmul.f32 %v1463, 0.2
        %v1466 = vsel %vm1464, %v1463, %v1465
        %1467 = vst [vmem:[#allocation2] sm:$0xff] 0.0
        %1468 = vst [vmem:[#allocation2 + $0x8] sm:$0xff] 0.0
        %1469 = vst.msk [vmem:[#allocation2 + $0x4] sm:$0xf] %vm1420, %v1466
        %v1470 = vld [vmem:[#allocation2] sm:$0xff]
        %v1471 = vld [vmem:[%s2] sm:$0x1]
        %v1472 = vperm.slane %v1471, 0
        %1474 = vrot.lane.b32.xlu0 %v1472, 119
        %v1475 = vpop.permute.xlu0 %1474
        %v1476 = vrot.slane %v1475, 4
        %vm1477 = vcmask 973824
        %v1478 = vsel %vm1477, %v1476, %v1475
        %v1480 = vmul.f32 %v1470, %v1478
        %v1481 = vld [vmem:[%s10] sm:$0xff]
        %v1482 = vld [vmem:[%s2 + $0x1] sm:$0x1]
        %v1483 = vperm.slane %v1482, 0
        %1485 = vrot.lane.b32.xlu0 %v1483, 120
        %v1486 = vpop.permute.xlu0 %1485
        %v1487 = vrot.slane %v1486, 4
        %vm1488 = vcmask 982016
        %v1489 = vsel %vm1488, %v1487, %v1486
        %v1491 = vmul.f32 %v1470, %v1489
        %s1492 = scalar_lea.vmem %s10, 8
        %v1493 = vld [vmem:[%s1492] sm:$0xff]
        %1495 = vst [vmem:[#allocation1] ss:$2 sm:$0xff] %v1491
        %v1496 = vld.sshfl [vmem:[#allocation1] sm:$0xff pattern:$0x75316420]
        %v1497 = vld.sshfl [vmem:[#allocation1 + $0x8] sm:$0xff pattern:$0x75316420]
        %1498 = vrot.lane.b32.xlu0 %v1496, 8
        %v1499 = vpop.permute.xlu0 %1498
        %1500 = vrot.lane.b32.xlu0 %v1497, 8
        %v1501 = vpop.permute.xlu0 %1500
        %vm1502 = vcmask 64512
        %v1503 = vsel %vm1502, %v1499, %v1501
        %v1505 = vsel %vm653, %v1493, 0
        %v1507 = vsel %vm526, %v1503, 0
        %1509 = vmatpush.msra.mxu0 0.0
        %1510 = vmatpush.msra.mxu0 0.0
        %1511 = vmatpush.msra.mxu0 0.0
        %1512 = vmatpush.msra.mxu0 0.0
        %1513 = vmatpush.msra.mxu0 0.0
        %1514 = vmatpush.msra.mxu0 0.0
        %1515 = vmatpush.msra.mxu0 0.0
        %1516 = vmatpush.msra.mxu0 0.0
        %1517 = vmatpush.msra.mxu0 0.0
        %1518 = vmatpush.msra.mxu0 0.0
        %1519 = vmatpush.msra.mxu0 0.0
        %1520 = vmatpush.msra.mxu0 0.0
        %1521 = vmatpush.msra.mxu0 0.0
        %1522 = vmatpush.msra.mxu0 0.0
        %1523 = vmatpush.msra.mxu0 0.0
        %1524 = vmatpush.msra.mxu0 %v1507
        %1525 = vmatmul.f32.gmra.mxu0 %v1505
        %v1526 = vpop.f32.mrf.mxu0
        %v1527 = vadd.f32 0.0, %v1526
        %1528 = vdwg.mxu0
        %1530 = vst [vmem:[#allocation1] ss:$2 sm:$0xff] %v1480
        %v1531 = vld.sshfl [vmem:[#allocation1] sm:$0xff pattern:$0x75316420]
        %v1532 = vld.sshfl [vmem:[#allocation1 + $0x8] sm:$0xff pattern:$0x75316420]
        %1533 = vrot.lane.b32.xlu0 %v1531, 9
        %v1534 = vpop.permute.xlu0 %1533
        %1535 = vrot.lane.b32.xlu0 %v1532, 9
        %v1536 = vpop.permute.xlu0 %1535
        %vm1537 = vcmask 72704
        %v1538 = vsel %vm1537, %v1534, %v1536
        %v1540 = vsel %vm653, %v1481, 0
        %v1542 = vsel %vm526, %v1538, 0
        %1544 = vmatpush.msra.mxu0 0.0
        %1545 = vmatpush.msra.mxu0 0.0
        %1546 = vmatpush.msra.mxu0 0.0
        %1547 = vmatpush.msra.mxu0 0.0
        %1548 = vmatpush.msra.mxu0 0.0
        %1549 = vmatpush.msra.mxu0 0.0
        %1550 = vmatpush.msra.mxu0 0.0
        %1551 = vmatpush.msra.mxu0 0.0
        %1552 = vmatpush.msra.mxu0 0.0
        %1553 = vmatpush.msra.mxu0 0.0
        %1554 = vmatpush.msra.mxu0 0.0
        %1555 = vmatpush.msra.mxu0 0.0
        %1556 = vmatpush.msra.mxu0 0.0
        %1557 = vmatpush.msra.mxu0 0.0
        %1558 = vmatpush.msra.mxu0 0.0
        %1559 = vmatpush.msra.mxu0 %v1542
        %1560 = vmatmul.f32.gmra.mxu0 %v1540
        %v1561 = vpop.f32.mrf.mxu0
        %v1562 = vadd.f32 %v1527, %v1561
        %1563 = vdwg.mxu0
        %v1564 = vld [vmem:[#allocation2] sm:$0xff]
        %v1565 = vld [vmem:[%s2 + $0x2] sm:$0x1]
        %v1566 = vperm.slane %v1565, 0
        %1568 = vrot.lane.b32.xlu0 %v1566, 121
        %v1569 = vpop.permute.xlu0 %1568
        %v1570 = vrot.slane %v1569, 4
        %vm1571 = vcmask 990208
        %v1572 = vsel %vm1571, %v1570, %v1569
        %v1574 = vmul.f32 %v1564, %v1572
        %s1575 = scalar_lea.vmem %s10, 16
        %v1576 = vld [vmem:[%s1575] sm:$0xff]
        %1578 = vst [vmem:[#allocation1] ss:$2 sm:$0xff] %v1574
        %v1579 = vld.sshfl [vmem:[#allocation1] sm:$0xff pattern:$0x75316420]
        %v1580 = vld.sshfl [vmem:[#allocation1 + $0x8] sm:$0xff pattern:$0x75316420]
        %1581 = vrot.lane.b32.xlu0 %v1579, 7
        %v1582 = vpop.permute.xlu0 %1581
        %1583 = vrot.lane.b32.xlu0 %v1580, 7
        %v1584 = vpop.permute.xlu0 %1583
        %vm1585 = vcmask 56320
        %v1586 = vsel %vm1585, %v1582, %v1584
        %v1588 = vsel %vm653, %v1576, 0
        %v1590 = vsel %vm526, %v1586, 0
        %1592 = vmatpush.msra.mxu0 0.0
        %1593 = vmatpush.msra.mxu0 0.0
        %1594 = vmatpush.msra.mxu0 0.0
        %1595 = vmatpush.msra.mxu0 0.0
        %1596 = vmatpush.msra.mxu0 0.0
        %1597 = vmatpush.msra.mxu0 0.0
        %1598 = vmatpush.msra.mxu0 0.0
        %1599 = vmatpush.msra.mxu0 0.0
        %1600 = vmatpush.msra.mxu0 0.0
        %1601 = vmatpush.msra.mxu0 0.0
        %1602 = vmatpush.msra.mxu0 0.0
        %1603 = vmatpush.msra.mxu0 0.0
        %1604 = vmatpush.msra.mxu0 0.0
        %1605 = vmatpush.msra.mxu0 0.0
        %1606 = vmatpush.msra.mxu0 0.0
        %1607 = vmatpush.msra.mxu0 %v1590
        %1608 = vmatmul.f32.gmra.mxu0 %v1588
        %v1609 = vpop.f32.mrf.mxu0
        %v1610 = vadd.f32 0.0, %v1609
        %1611 = vdwg.mxu0
        %v1612 = vadd.f32 %v1562, %v1610
        %v1613 = vld [vmem:[#allocation2] sm:$0xff]
        %v1614 = vld [vmem:[%s2 + $0x3] sm:$0x1]
        %v1615 = vperm.slane %v1614, 0
        %1617 = vrot.lane.b32.xlu0 %v1615, 127
        %v1618 = vpop.permute.xlu0 %1617
        %v1619 = vrot.slane %v1618, 4
        %v1620 = vsel %vm863, %v1619, %v1618
        %v1622 = vmul.f32 %v1613, %v1620
        %s1623 = scalar_lea.vmem %s10, 24
        %v1624 = vld [vmem:[%s1623] sm:$0xff]
        %1626 = vst [vmem:[#allocation1] ss:$2 sm:$0xff] %v1622
        %v1627 = vld.sshfl [vmem:[#allocation1] sm:$0xff pattern:$0x75316420]
        %v1628 = vld.sshfl [vmem:[#allocation1 + $0x8] sm:$0xff pattern:$0x75316420]
        %1629 = vrot.lane.b32.xlu0 %v1627, 1
        %v1630 = vpop.permute.xlu0 %1629
        %1631 = vrot.lane.b32.xlu0 %v1628, 1
        %v1632 = vpop.permute.xlu0 %1631
        %v1633 = vsel %vm885, %v1630, %v1632
        %v1635 = vsel %vm653, %v1624, 0
        %v1637 = vsel %vm526, %v1633, 0
        %1639 = vmatpush.msra.mxu0 0.0
        %1640 = vmatpush.msra.mxu0 0.0
        %1641 = vmatpush.msra.mxu0 0.0
        %1642 = vmatpush.msra.mxu0 0.0
        %1643 = vmatpush.msra.mxu0 0.0
        %1644 = vmatpush.msra.mxu0 0.0
        %1645 = vmatpush.msra.mxu0 0.0
        %1646 = vmatpush.msra.mxu0 0.0
        %1647 = vmatpush.msra.mxu0 0.0
        %1648 = vmatpush.msra.mxu0 0.0
        %1649 = vmatpush.msra.mxu0 0.0
        %1650 = vmatpush.msra.mxu0 0.0
        %1651 = vmatpush.msra.mxu0 0.0
        %1652 = vmatpush.msra.mxu0 0.0
        %1653 = vmatpush.msra.mxu0 0.0
        %1654 = vmatpush.msra.mxu0 %v1637
        %1655 = vmatmul.f32.gmra.mxu0 %v1635
        %v1656 = vpop.f32.mrf.mxu0
        %v1657 = vadd.f32 0.0, %v1656
        %1658 = vdwg.mxu0
        %v1659 = vadd.f32 %v1612, %v1657
        %v1660 = vld [vmem:[#allocation2 + $0x4] sm:$0xf]
        %v1661 = vld [vmem:[%s2 + $0x4] sm:$0x1]
        %v1662 = vperm.slane %v1661, 0
        %v1663 = vmul.f32 %v1660, %v1662
        %s1664 = scalar_lea.vmem %s10, 32
        %v1665 = vld [vmem:[%s1664] sm:$0xff]
        %v1667 = vsel %vm653, %v1665, 0
        %v1670 = vsel %vm526, %v1663, 0
        %1672 = vmatpush.msra.mxu0 0.0
        %1673 = vmatpush.msra.mxu0 0.0
        %1674 = vmatpush.msra.mxu0 0.0
        %1675 = vmatpush.msra.mxu0 0.0
        %1676 = vmatpush.msra.mxu0 0.0
        %1677 = vmatpush.msra.mxu0 0.0
        %1678 = vmatpush.msra.mxu0 0.0
        %1679 = vmatpush.msra.mxu0 0.0
        %1680 = vmatpush.msra.mxu0 0.0
        %1681 = vmatpush.msra.mxu0 0.0
        %1682 = vmatpush.msra.mxu0 0.0
        %1683 = vmatpush.msra.mxu0 0.0
        %1684 = vmatpush.msra.mxu0 0.0
        %1685 = vmatpush.msra.mxu0 0.0
        %1686 = vmatpush.msra.mxu0 0.0
        %1687 = vmatpush.msra.mxu0 %v1670
        %1688 = vmatmul.f32.gmra.mxu0 %v1667
        %v1689 = vpop.f32.mrf.mxu0
        %v1690 = vadd.f32 0.0, %v1689
        %1691 = vdwg.mxu0
        %v1692 = vadd.f32 %v1659, %v1690
        %v1693 = vld [vmem:[%s2 + $0x5] sm:$0x1]
        %v1694 = vperm.slane %v1693, 0
        %1696 = vrot.lane.b32.xlu0 %v1694, 1
        %v1697 = vpop.permute.xlu0 %1696
        %v1699 = vmul.f32 %v1660, %v1697
        %s1700 = scalar_lea.vmem %s10, 40
        %v1701 = vld [vmem:[%s1700] sm:$0xff]
        %1703 = vst [vmem:[#allocation1] ss:$2 sm:$0xff] %v1699
        %v1704 = vld.sshfl [vmem:[#allocation1] sm:$0xff pattern:$0x75316420]
        %1705 = vrot.lane.b32.xlu0 %v1704, 127
        %v1706 = vpop.permute.xlu0 %1705
        %v1708 = vsel %vm653, %v1701, 0
        %v1710 = vsel %vm526, %v1706, 0
        %1712 = vmatpush.msra.mxu0 0.0
        %1713 = vmatpush.msra.mxu0 0.0
        %1714 = vmatpush.msra.mxu0 0.0
        %1715 = vmatpush.msra.mxu0 0.0
        %1716 = vmatpush.msra.mxu0 0.0
        %1717 = vmatpush.msra.mxu0 0.0
        %1718 = vmatpush.msra.mxu0 0.0
        %1719 = vmatpush.msra.mxu0 0.0
        %1720 = vmatpush.msra.mxu0 0.0
        %1721 = vmatpush.msra.mxu0 0.0
        %1722 = vmatpush.msra.mxu0 0.0
        %1723 = vmatpush.msra.mxu0 0.0
        %1724 = vmatpush.msra.mxu0 0.0
        %1725 = vmatpush.msra.mxu0 0.0
        %1726 = vmatpush.msra.mxu0 0.0
        %1727 = vmatpush.msra.mxu0 %v1710
        %1728 = vmatmul.f32.gmra.mxu0 %v1708
        %v1729 = vpop.f32.mrf.mxu0
        %v1730 = vadd.f32 0.0, %v1729
        %1731 = vdwg.mxu0
        %v1732 = vadd.f32 %v1692, %v1730
        %v1733 = vld [vmem:[#allocation2 + $0x4] sm:$0xf]
        %v1734 = vld [vmem:[%s2 + $0x6] sm:$0x1]
        %v1735 = vperm.slane %v1734, 0
        %1737 = vrot.lane.b32.xlu0 %v1735, 7
        %v1738 = vpop.permute.xlu0 %1737
        %v1740 = vmul.f32 %v1733, %v1738
        %s1741 = scalar_lea.vmem %s10, 48
        %v1742 = vld [vmem:[%s1741] sm:$0xff]
        %1744 = vst [vmem:[#allocation1] ss:$2 sm:$0xff] %v1740
        %v1745 = vld.sshfl [vmem:[#allocation1] sm:$0xff pattern:$0x75316420]
        %1746 = vrot.lane.b32.xlu0 %v1745, 121
        %v1747 = vpop.permute.xlu0 %1746
        %v1749 = vsel %vm653, %v1742, 0
        %v1751 = vsel %vm526, %v1747, 0
        %1753 = vmatpush.msra.mxu0 0.0
        %1754 = vmatpush.msra.mxu0 0.0
        %1755 = vmatpush.msra.mxu0 0.0
        %1756 = vmatpush.msra.mxu0 0.0
        %1757 = vmatpush.msra.mxu0 0.0
        %1758 = vmatpush.msra.mxu0 0.0
        %1759 = vmatpush.msra.mxu0 0.0
        %1760 = vmatpush.msra.mxu0 0.0
        %1761 = vmatpush.msra.mxu0 0.0
        %1762 = vmatpush.msra.mxu0 0.0
        %1763 = vmatpush.msra.mxu0 0.0
        %1764 = vmatpush.msra.mxu0 0.0
        %1765 = vmatpush.msra.mxu0 0.0
        %1766 = vmatpush.msra.mxu0 0.0
        %1767 = vmatpush.msra.mxu0 0.0
        %1768 = vmatpush.msra.mxu0 %v1751
        %1769 = vmatmul.f32.gmra.mxu0 %v1749
        %v1770 = vpop.f32.mrf.mxu0
        %v1771 = vadd.f32 0.0, %v1770
        %1772 = vdwg.mxu0
        %v1773 = vadd.f32 %v1732, %v1771
        %v1774 = vld [vmem:[#allocation2 + $0x4] sm:$0xf]
        %v1775 = vld [vmem:[%s2 + $0x7] sm:$0x1]
        %v1776 = vperm.slane %v1775, 0
        %1778 = vrot.lane.b32.xlu0 %v1776, 8
        %v1779 = vpop.permute.xlu0 %1778
        %v1781 = vmul.f32 %v1774, %v1779
        %s1782 = scalar_lea.vmem %s10, 56
        %v1783 = vld [vmem:[%s1782] sm:$0xff]
        %1785 = vst [vmem:[#allocation1] ss:$2 sm:$0xff] %v1781
        %v1786 = vld.sshfl [vmem:[#allocation1] sm:$0xff pattern:$0x75316420]
        %1787 = vrot.lane.b32.xlu0 %v1786, 120
        %v1788 = vpop.permute.xlu0 %1787
        %v1790 = vsel %vm653, %v1783, 0
        %v1792 = vsel %vm526, %v1788, 0
        %1794 = vmatpush.msra.mxu0 0.0
        %1795 = vmatpush.msra.mxu0 0.0
        %1796 = vmatpush.msra.mxu0 0.0
        %1797 = vmatpush.msra.mxu0 0.0
        %1798 = vmatpush.msra.mxu0 0.0
        %1799 = vmatpush.msra.mxu0 0.0
        %1800 = vmatpush.msra.mxu0 0.0
        %1801 = vmatpush.msra.mxu0 0.0
        %1802 = vmatpush.msra.mxu0 0.0
        %1803 = vmatpush.msra.mxu0 0.0
        %1804 = vmatpush.msra.mxu0 0.0
        %1805 = vmatpush.msra.mxu0 0.0
        %1806 = vmatpush.msra.mxu0 0.0
        %1807 = vmatpush.msra.mxu0 0.0
        %1808 = vmatpush.msra.mxu0 0.0
        %1809 = vmatpush.msra.mxu0 %v1792
        %1810 = vmatmul.f32.gmra.mxu0 %v1790
        %v1811 = vpop.f32.mrf.mxu0
        %v1812 = vadd.f32 0.0, %v1811
        %1813 = vdwg.mxu0
        %v1814 = vadd.f32 %v1773, %v1812
        %v1815 = vld [vmem:[#allocation2 + $0x4] sm:$0xf]
        %v1816 = vld [vmem:[%s2 + $0x8] sm:$0x1]
        %v1817 = vperm.slane %v1816, 0
        %1819 = vrot.lane.b32.xlu0 %v1817, 9
        %v1820 = vpop.permute.xlu0 %1819
        %v1822 = vmul.f32 %v1815, %v1820
        %s1823 = scalar_lea.vmem %s10, 64
        %v1824 = vld [vmem:[%s1823] sm:$0xff]
        %1826 = vst [vmem:[#allocation1] ss:$2 sm:$0xff] %v1822
        %v1827 = vld.sshfl [vmem:[#allocation1] sm:$0xff pattern:$0x75316420]
        %1828 = vrot.lane.b32.xlu0 %v1827, 119
        %v1829 = vpop.permute.xlu0 %1828
        %v1831 = vsel %vm653, %v1824, 0
        %v1833 = vsel %vm526, %v1829, 0
        %1835 = vmatpush.msra.mxu0 0.0
        %1836 = vmatpush.msra.mxu0 0.0
        %1837 = vmatpush.msra.mxu0 0.0
        %1838 = vmatpush.msra.mxu0 0.0
        %1839 = vmatpush.msra.mxu0 0.0
        %1840 = vmatpush.msra.mxu0 0.0
        %1841 = vmatpush.msra.mxu0 0.0
        %1842 = vmatpush.msra.mxu0 0.0
        %1843 = vmatpush.msra.mxu0 0.0
        %1844 = vmatpush.msra.mxu0 0.0
        %1845 = vmatpush.msra.mxu0 0.0
        %1846 = vmatpush.msra.mxu0 0.0
        %1847 = vmatpush.msra.mxu0 0.0
        %1848 = vmatpush.msra.mxu0 0.0
        %1849 = vmatpush.msra.mxu0 0.0
        %1850 = vmatpush.msra.mxu0 %v1833
        %1851 = vmatmul.f32.gmra.mxu0 %v1831
        %v1852 = vpop.f32.mrf.mxu0
        %v1853 = vadd.f32 0.0, %v1852
        %1854 = vdwg.mxu0
        %v1855 = vadd.f32 %v1814, %v1853
        %v1856 = vld [vmem:[%s11] sm:$0xff]
        %1858 = vset.pattern.permute.xlu0 0
        %1859 = vperm.xlu0 %1858, %v1856
        %v1860 = vpop.permute.xlu0 %1859
        %v1862 = vadd.f32 %v1855, %v1860
        %v1864 = vsel %vm653, %v518, 0
        %v1867 = vsel %vm526, %v516, 0
        %1869 = vmatpush.msra.mxu0 0.0
        %1870 = vmatpush.msra.mxu0 0.0
        %1871 = vmatpush.msra.mxu0 0.0
        %1872 = vmatpush.msra.mxu0 0.0
        %1873 = vmatpush.msra.mxu0 0.0
        %1874 = vmatpush.msra.mxu0 0.0
        %1875 = vmatpush.msra.mxu0 0.0
        %1876 = vmatpush.msra.mxu0 0.0
        %1877 = vmatpush.msra.mxu0 0.0
        %1878 = vmatpush.msra.mxu0 0.0
        %1879 = vmatpush.msra.mxu0 0.0
        %1880 = vmatpush.msra.mxu0 0.0
        %1881 = vmatpush.msra.mxu0 0.0
        %1882 = vmatpush.msra.mxu0 0.0
        %1883 = vmatpush.msra.mxu0 0.0
        %1884 = vmatpush.msra.mxu0 %v1867
        %1885 = vmatmul.f32.gmra.mxu0 %v1864
        %v1886 = vpop.f32.mrf.mxu0
        %v1887 = vadd.f32 %v1862, %v1886
        %1888 = vdwg.mxu0
        %v1889 = vmul.f32 %v1887, 0.70710677
        %vm1890 = vcmask 523264
        %1891 = vst.msk [vmem:[%s433] sm:$0xff] %vm1890, %v1889
        %s1892 = sand.u32 %s313, 1
        %s1893 = scalar_lea.sflag [#allocation4], %s1892
        %s1894 = sand.u32 %s313, 1
        %s1895 = smul.addr %s1894, 8
        %s1896 = scalar_lea.vmem [#allocation3], %s1895
        // Predicated region
        $region73: #{tpu_custom_call.1} parent=71 // pred_check
          %p1897 = pneg %p323
        $region74: #{tpu_custom_call.1} parent=71 // pred_check_branch
          %1899 = sbr.rel (%p1897) target = $region76
        $region75: #{tpu_custom_call.1} parent=71 // pred_region
          %1901 = vsyncadd %s1893, 0
          %s1902 = smul.addr %s27, 8
          %s1903 = scalar_lea.hbm %s13, %s1902
          %s1905 = sshll.u32 %s1896, 4
          %s1906 = int_to_ptr.vmem [resolvable:$true] %s1905
          %s1907 = sshll.u32 %s1903, 4
          %s1908 = int_to_ptr.hbm [resolvable:$true] %s1907
          %1910 = dma.vmem_to_hbm [thread:$0]  %s1906, 128, %s1908, %s1893
        $region76: #{tpu_custom_call.1} parent=71 // pred_fallthru
          _
      $region72: #{tpu_custom_call.1} parent=5 // pred_fallthru
        _
      %p1911 = scmp.le.s32.totalorder 2, %s22
      // Predicated region
      $region77: #{tpu_custom_call.1} parent=5 // pred_check
        %p1912 = pneg %p1911
      $region78: #{tpu_custom_call.1} parent=5 // pred_check_branch
        %1914 = sbr.rel (%p1912) target = $region80
      $region79: #{tpu_custom_call.1} parent=5 // pred_region
        %s1915 = ssub.s32 %s22, 2
        // Predicated region
        $region81: #{tpu_custom_call.1} parent=79 // pred_check
          %p1916 = pneg %p329
        $region82: #{tpu_custom_call.1} parent=79 // pred_check_branch
          %1918 = sbr.rel (%p1916) target = $region84
        $region83: #{tpu_custom_call.1} parent=79 // pred_region
          %s1919 = sand.u32 %s314, 1
          %s1920 = scalar_lea.sflag [#allocation4], %s1919
          %s1921 = sand.u32 %s314, 1
          %s1922 = smul.addr %s1921, 8
          %s1923 = scalar_lea.vmem [#allocation3], %s1922
          %1925 = dma.done %s1920, 128
        $region84: #{tpu_custom_call.1} parent=79 // pred_fallthru
          _
      $region80: #{tpu_custom_call.1} parent=5 // pred_fallthru
        _
    $region6: #{tpu_custom_call.1} parent=1 // loop_footer
      %s26 = sadd.s32 1, %s22
    $region7: #{tpu_custom_call.1} parent=1 // loop_footer_branch
      %21 = sbr.rel target = $region3
    $region8: #{tpu_custom_call.1} parent=1 // loop_exit
      _
    %1926 = vsyncpa [#allocation4], 1
    %s1927 = scalar_lea.sflag [#allocation4], 1
    %1928 = vsyncpa %s1927, 1

</llo_original>
